<compile_context>
chip_gen: v7x
topology: tpu7x:2x2x1
jax: 0.10.0
libtpu: 0.0.40
codegen_flags: <defaults>
</compile_context>

<pallas_src>
import functools

import jax
import jax.numpy as jnp
from jax.experimental import pallas as pl
from jax.experimental.pallas import tpu as pltpu


def _round_up(x: int, m: int) -> int:
    return ((x + m - 1) // m) * m


def _vmem_budget_bytes() -> int:
    """Scoped-VMEM budget: ~75% of physical per-core VMEM (48 MiB on v7x,
    ~96 MiB on v5e/v6e), leaving headroom for compiler scratch / spill."""
    phys = 64 * 1024 * 1024  # conservative fallback: v7x per-core physical VMEM
    try:
        phys = int(pltpu.get_tpu_info().vmem_capacity_bytes)
    except Exception:
        pass
    return (phys * 3) // 4


def _pick_tiles(n, num_patches, patch_dim, out_dim, budget):
    """Choose (tn, pt) so double-buffered blocks + in-kernel temporaries fit the
    VMEM budget at any patch count (e.g. 196 patches, patch_dim 768 in prod)."""
    # Patch-chunk size: full patch axis when small, else a sublane-aligned chunk
    # so VMEM use is decoupled from num_patches.
    pt = num_patches if num_patches <= 32 else 16
    p_pad = _round_up(num_patches, pt)

    per_roi = (pt * patch_dim * 2 * 2      # bf16 patch block, double-buffered
               + pt * patch_dim * 4        # f32 widening inside the chunk sum
               + patch_dim * 4             # f32 accumulator scratch row
               + out_dim * 4 * 2           # f32 output block, double-buffered
               + out_dim * 4 * 2)          # emb / normalize temporaries
    fixed = patch_dim * out_dim * 2 * 2 + (1 << 20)   # fused weight (dbl-buf) + slack

    tn = max(8, ((budget - fixed) // per_roi) // 8 * 8)
    tn = min(tn, 256, _round_up(n, 8))
    # v7x megacore: ensure >=2 ROI tiles at production ROI counts, prefer an even
    # count so both TensorCores get balanced work (no-op for the tiny demo n=8).
    if n >= 16:
        tn = min(tn, _round_up(-(-n // 2), 8))
    n_tiles = -(-n // tn)
    if n_tiles > 1 and n_tiles % 2:
        tn = max(8, _round_up(-(-n // (n_tiles + 1)), 8))
    return tn, pt, p_pad


def clip_encode_kernel(patches_ref, w_fused_ref, out_ref, acc_ref):
    """One (ROI-tile, patch-chunk) grid step.

    patches_ref : (tn, pt, Dp) bf16  chunk of flattened ROI patch vectors
    w_fused_ref : (Dp, 512)    bf16  (patch-embed @ projection) / num_patches
    out_ref     : (tn, 512)    f32   L2-normalized CLIP embeddings
    acc_ref     : (tn, Dp)     f32   running patch-sum accumulator (scratch)
    """
    k = pl.program_id(1)

    @pl.when(k == 0)
    def _():
        acc_ref[...] = jnp.zeros_like(acc_ref)

    # Accumulate the patch sum in f32 without keeping a full f32 copy of the whole
    # ROI tile live; the mean's 1/num_patches is folded into w_fused outside.
    acc_ref[...] += jnp.sum(patches_ref[...], axis=1, dtype=jnp.float32)

    @pl.when(k == pl.num_programs(1) - 1)
    def _():
        # Single lane-aligned (tn, Dp) @ (Dp, 512) MXU matmul, bf16 in / f32 acc.
        emb = jnp.dot(acc_ref[...].astype(jnp.bfloat16), w_fused_ref[...],
                      preferred_element_type=jnp.float32)        # (tn, 512)
        # clip_encodings /= clip_encodings.norm(dim=-1, keepdim=True)
        # rsqrt*x (EUP) instead of sqrt+divide.  sumsq==0 only happens on the
        # zero-padded ROI rows (sliced off by the caller); guard them so they
        # don't emit NaNs and trip debug/NaN checks.
        sumsq = jnp.sum(emb * emb, axis=-1, keepdims=True)
        inv = jax.lax.rsqrt(jnp.where(sumsq > 0.0, sumsq, 1.0))
        out_ref[...] = (emb * inv).astype(out_ref.dtype)


@functools.partial(jax.jit, static_argnames=("patch_size",))
def clip_model_forward(crops_nchw, w_embed, w_proj, *, patch_size):
    """NCHW ROI crops -> (num_rois, 512) L2-normalized embeddings."""
    n, c, h, w = crops_nchw.shape
    ph, pw = h // patch_size, w // patch_size
    num_patches = ph * pw
    patch_dim = c * patch_size * patch_size
    out_dim = w_proj.shape[1]

    # (N, C, H, W) -> (N, P, C*p*p) bf16, inside the same jit so XLA fuses the
    # relayout with the cast.
    # TODO(synk): folding this patchify into the kernel (DMA the NCHW crop tile and
    #             pool in-kernel) would halve end-to-end HBM traffic; kept in the
    #             wrapper for lowering robustness of the lane-axis split/reshape.
    patches = crops_nchw.reshape(n, c, ph, patch_size, pw, patch_size)
    patches = patches.transpose(0, 2, 4, 1, 3, 5).reshape(n, num_patches, patch_dim)
    patches = patches.astype(jnp.bfloat16)

    # Pre-fuse the two input-independent weight matrices and fold in the mean's
    # 1/num_patches.  NOTE: only valid because the encoder stub is linear; revert
    # if a real (nonlinear) transformer replaces the stub.
    w_fused = (jnp.dot(w_embed.astype(jnp.float32), w_proj.astype(jnp.float32),
                       preferred_element_type=jnp.float32)
               / float(num_patches)).astype(jnp.bfloat16)

    budget = _vmem_budget_bytes()
    tn, pt, p_pad = _pick_tiles(n, num_patches, patch_dim, out_dim, budget)
    n_pad = _round_up(n, tn)
    if n_pad != n or p_pad != num_patches:
        # Zero padding is neutral for the patch sum; padded ROI rows are sliced off.
        patches = jnp.pad(patches, ((0, n_pad - n), (0, p_pad - num_patches), (0, 0)))

    grid = (n_pad // tn, p_pad // pt)

    out = pl.pallas_call(
        clip_encode_kernel,
        out_shape=jax.ShapeDtypeStruct((n_pad, out_dim), jnp.float32),
        grid=grid,
        in_specs=[
            pl.BlockSpec((tn, pt, patch_dim), lambda i, k: (i, k, 0)),
            pl.BlockSpec((patch_dim, out_dim), lambda i, k: (0, 0)),
        ],
        out_specs=pl.BlockSpec((tn, out_dim), lambda i, k: (i, 0)),
        scratch_shapes=[pltpu.VMEM((tn, patch_dim), jnp.float32)],
        compiler_params=pltpu.CompilerParams(
            # ROI tiles independent -> shard across both TensorCores on v7x;
            # patch-chunk axis is a reduction -> arbitrary.
            dimension_semantics=("parallel", "arbitrary"),
            vmem_limit_bytes=int(budget),
        ),
    )(patches, w_fused)

    return out[:n]


if __name__ == "__main__":
    # Small deterministic config (cfg analogue).
    batch_size = 2                      # cfg['data']['train_batch_size']
    topk_k = 4                          # cfg['evaluation']['topk_k']
    num_rois = batch_size * topk_k      # output_roi.shape[0] == 8

    C, H, W = 3, 32, 32                 # preprocessed ROI crop size (stand-in for 224)
    PATCH = 16                          # ViT-B/16 patch size
    EMBED_DIM = 128                     # internal width (stand-in for 768)
    OUT_DIM = 512                       # CLIP image-embedding dim

    patch_dim = C * PATCH * PATCH

    key = jax.random.PRNGKey(0)
    k_crops, k_we, k_wp = jax.random.split(key, 3)

    # Pre-extracted / preprocessed ROI crops, NCHW like PyTorch.
    crops = jax.random.normal(k_crops, (num_rois, C, H, W), dtype=jnp.float32)
    # Deterministic synthetic encoder weights (ViT patch-embed + projection shapes).
    w_embed = jax.random.normal(k_we, (patch_dim, EMBED_DIM), dtype=jnp.float32) * 0.02
    w_proj = jax.random.normal(k_wp, (EMBED_DIM, OUT_DIM), dtype=jnp.float32) * 0.02

    out = clip_model_forward(crops, w_embed, w_proj, patch_size=PATCH)
    out = jax.block_until_ready(out)

    # Sanity checks: shape (num_rois, 512), unit L2 norm per row.
    assert out.shape == (num_rois, OUT_DIM), out.shape
    norms = jnp.linalg.norm(out, axis=-1)
    assert jnp.allclose(norms, 1.0, atol=1e-4), norms

    # Pure-f32 reference of the linear encoder stub (tolerance covers bf16 rounding
    # of the pooled activations and the pre-fused weight).
    ph = pw = H // PATCH
    ref_p = crops.reshape(num_rois, C, ph, PATCH, pw, PATCH)
    ref_p = ref_p.transpose(0, 2, 4, 1, 3, 5).reshape(num_rois, ph * pw, patch_dim)
    ref_emb = ref_p.mean(axis=1) @ w_embed @ w_proj
    ref = ref_emb / jnp.linalg.norm(ref_emb, axis=-1, keepdims=True)
    assert jnp.allclose(out, ref, atol=2e-2), float(jnp.max(jnp.abs(out - ref)))

    print("KERNEL_OK")
</pallas_src>

<mosaic_0001>
module attributes {stable_mosaic.version = 11 : i64} {
  func.func @clip_encode_kernel(%arg0: i32, %arg1: i32, %arg2: memref<8x4x768xbf16, #tpu.memory_space<vmem>>, %arg3: memref<768x512xbf16, #tpu.memory_space<vmem>>, %arg4: memref<8x512xf32, #tpu.memory_space<vmem>>, %arg5: memref<8x768xf32, #tpu.memory_space<vmem>>) attributes {dimension_semantics = [#tpu.dimension_semantics<parallel>, #tpu.dimension_semantics<arbitrary>], iteration_bounds = array<i64: 1, 1>, scalar_prefetch = 0 : i64, scratch_operands = 1 : i64, tpu.core_type = #tpu.core_type<tc>, window_params = [{transform_indices = @transform_0, window_bounds = array<i64: 8, 4, 768>}, {pipeline_mode = #tpu.pipeline_mode<synchronous>, transform_indices = @transform_1, window_bounds = array<i64: 768, 512>}, {transform_indices = @transform_2, window_bounds = array<i64: 8, 512>}]} {
    %c0_i32 = arith.constant 0 : i32
    %0 = arith.cmpi eq, %arg1, %c0_i32 : i32
    %1 = arith.extui %0 : i1 to i32
    %c0_i32_0 = arith.constant 0 : i32
    %2 = arith.cmpi ne, %1, %c0_i32_0 : i32
    scf.if %2 {
      %cst_9 = arith.constant 0.000000e+00 : f32
      %12 = vector.broadcast %cst_9 : f32 to vector<8x768xf32>
      %c0_10 = arith.constant 0 : index
      %c0_11 = arith.constant 0 : index
      %13 = vector.load %arg5[%c0_10, %c0_11] : memref<8x768xf32, #tpu.memory_space<vmem>>, vector<8x768xf32>
      tpu.vector_store %arg5[%c0_10, %c0_11], %12 {strides = array<i32>} : memref<8x768xf32, #tpu.memory_space<vmem>>, vector<8x768xf32>,
    } else {
    }
    %c0 = arith.constant 0 : index
    %c0_1 = arith.constant 0 : index
    %3 = vector.load %arg5[%c0, %c0_1] : memref<8x768xf32, #tpu.memory_space<vmem>>, vector<8x768xf32>
    %c0_2 = arith.constant 0 : index
    %c0_3 = arith.constant 0 : index
    %c0_4 = arith.constant 0 : index
    %4 = vector.load %arg2[%c0_2, %c0_3, %c0_4] : memref<8x4x768xbf16, #tpu.memory_space<vmem>>, vector<8x4x768xbf16>
    %5 = arith.extf %4 : vector<8x4x768xbf16> to vector<8x4x768xf32>
    %cst = arith.constant dense<0.000000e+00> : vector<8x768xf32>
    %6 = vector.multi_reduction <add>, %5, %cst [1] : vector<8x4x768xf32> to vector<8x768xf32>
    %7 = arith.addf %3, %6 : vector<8x768xf32>
    %c0_5 = arith.constant 0 : index
    %c0_6 = arith.constant 0 : index
    %8 = vector.load %arg5[%c0_5, %c0_6] : memref<8x768xf32, #tpu.memory_space<vmem>>, vector<8x768xf32>
    tpu.vector_store %arg5[%c0_5, %c0_6], %7 {strides = array<i32>} : memref<8x768xf32, #tpu.memory_space<vmem>>, vector<8x768xf32>,
    %c0_i32_7 = arith.constant 0 : i32
    %9 = arith.cmpi eq, %arg1, %c0_i32_7 : i32
    %10 = arith.extui %9 : i1 to i32
    %c0_i32_8 = arith.constant 0 : i32
    %11 = arith.cmpi ne, %10, %c0_i32_8 : i32
    scf.if %11 {
      %c0_9 = arith.constant 0 : index
      %c0_10 = arith.constant 0 : index
      %12 = vector.load %arg5[%c0_9, %c0_10] : memref<8x768xf32, #tpu.memory_space<vmem>>, vector<8x768xf32>
      %13 = arith.truncf %12 : vector<8x768xf32> to vector<8x768xbf16>
      %c0_11 = arith.constant 0 : index
      %c0_12 = arith.constant 0 : index
      %14 = vector.load %arg3[%c0_11, %c0_12] : memref<768x512xbf16, #tpu.memory_space<vmem>>, vector<768x512xbf16>
      %cst_13 = arith.constant dense<0.000000e+00> : vector<8x512xf32>
      %15 = tpu.matmul %13, %14, %cst_13 {dimension_numbers = #tpu.dot_dimension_numbers<[1], [0], [0], [1], [0, 0, 1, 1], [], []>} : vector<8x768xbf16>, vector<768x512xbf16>, vector<8x512xf32> -> vector<8x512xf32>
      %16 = arith.mulf %15, %15 : vector<8x512xf32>
      %cst_14 = arith.constant dense<0.000000e+00> : vector<8xf32>
      %17 = vector.multi_reduction <add>, %16, %cst_14 [1] : vector<8x512xf32> to vector<8xf32>
      %18 = vector.shape_cast %17 : vector<8xf32> to vector<8x1xf32>
      %cst_15 = arith.constant 0.000000e+00 : f32
      %19 = vector.broadcast %cst_15 : f32 to vector<8x1xf32>
      %20 = arith.cmpf ogt, %18, %19 : vector<8x1xf32>
      %cst_16 = arith.constant 1.000000e+00 : f32
      %21 = vector.broadcast %cst_16 : f32 to vector<8x1xf32>
      %22 = arith.select %20, %18, %21 : vector<8x1xi1>, vector<8x1xf32>
      %23 = math.rsqrt %22 : vector<8x1xf32>
      %24 = vector.broadcast %23 : vector<8x1xf32> to vector<8x512xf32>
      %25 = arith.mulf %15, %24 : vector<8x512xf32>
      %c0_17 = arith.constant 0 : index
      %c0_18 = arith.constant 0 : index
      %26 = vector.load %arg4[%c0_17, %c0_18] : memref<8x512xf32, #tpu.memory_space<vmem>>, vector<8x512xf32>
      tpu.vector_store %arg4[%c0_17, %c0_18], %25 {strides = array<i32>} : memref<8x512xf32, #tpu.memory_space<vmem>>, vector<8x512xf32>,
    } else {
    }
    return
  }
  func.func @transform_0(%arg0: i32, %arg1: i32) -> (i32, i32, i32) {
    %c0_i32 = arith.constant 0 : i32
    %c0_i32_0 = arith.constant 0 : i32
    return %arg0, %arg1, %c0_i32 : i32, i32, i32
  }
  func.func @transform_1(%arg0: i32, %arg1: i32) -> (i32, i32) {
    %c0_i32 = arith.constant 0 : i32
    %c0_i32_0 = arith.constant 0 : i32
    %c0_i32_1 = arith.constant 0 : i32
    return %c0_i32, %c0_i32_0 : i32, i32
  }
  func.func @transform_2(%arg0: i32, %arg1: i32) -> (i32, i32) {
    %c0_i32 = arith.constant 0 : i32
    %c0_i32_0 = arith.constant 0 : i32
    return %arg0, %c0_i32 : i32, i32
  }
}

</mosaic_0001>

<llo_original>
// kernel: clip_model_forward.1
$region0: #{clip_model_forward.1}
  #allocation0 [shape = 'u32[]', space=smem, size = 0x4, offset = 0x4, fixed_abs, tag = 'smem constant byte address 0x4 - core index']
  #allocation1 [shape = 'u32[144,128]{1,0:T(1,128)}', space=vmem, size = 0x12000, scoped, tag = 'internal scratch']
  #allocation2 [shape = 'f32[8,768]{1,0:T(8,128)}', space=vmem, size = 0x6000, scoped, tag = 'scratch operand']
  %s0 = inlined_call_operand.vmem [shape: bf16[8,4,768], index: 0, kind: input, shape index: {}]
  %s1 = inlined_call_operand.vmem [shape: bf16[768,512], index: 1, kind: input, shape index: {}]
  %s2 = inlined_call_operand.hbm [shape: f32[8,512], index: 2, kind: output, shape index: {}]
  %s3 = sld [smem:[#allocation0]]
  $region26: #{clip_model_forward.1} parent=0
    _
  %s5 = ssub.s32 1, %s3
  %s6 = scalar_select 0, %s5, %s3
  $region1: #{clip_model_forward.1} parent=0
    #allocation3 [shape = 'u8[16384]{0}', space=vmem, size = 0x4000, scoped, tag = 'output window, operand 0, single buffered']
    #allocation4 [shape = 's32[1]{0}', space=sflag, size = 0x4, scoped, tag = 'scoped memory for clip_model_forward.1']
    %7 = vsyncpa [#allocation4], 0
    // Predicated region
    $region2: #{clip_model_forward.1} parent=1 // pred_check
      _
    $region3: #{clip_model_forward.1} parent=1 // pred_check_branch
      %9 = sbr.rel (0) target = $region5
    $region4: #{clip_model_forward.1} parent=1 // pred_region
      _
    $region5: #{clip_model_forward.1} parent=1 // pred_fallthru
      _
    // Predicated region
    $region6: #{clip_model_forward.1} parent=1 // pred_check
      _
    $region7: #{clip_model_forward.1} parent=1 // pred_check_branch
      %11 = sbr.rel (0) target = $region9
    $region8: #{clip_model_forward.1} parent=1 // pred_region
      _
    $region9: #{clip_model_forward.1} parent=1 // pred_fallthru
      _
    %p12 = scmp.eq.s32.totalorder 0, 0
    // Predicated region
    $region10: #{clip_model_forward.1} parent=1 // pred_check
      %p13 = pneg %p12
    $region11: #{clip_model_forward.1} parent=1 // pred_check_branch
      %15 = sbr.rel (%p13) target = $region13
    $region12: #{clip_model_forward.1} parent=1 // pred_region
      %16 = vst [vmem:[#allocation2] sm:$0xff] 0.0
      %17 = vst [vmem:[#allocation2 + $0x8] sm:$0xff] 0.0
      %18 = vst [vmem:[#allocation2 + $0x10] sm:$0xff] 0.0
      %19 = vst [vmem:[#allocation2 + $0x18] sm:$0xff] 0.0
      %20 = vst [vmem:[#allocation2 + $0x20] sm:$0xff] 0.0
      %21 = vst [vmem:[#allocation2 + $0x28] sm:$0xff] 0.0
    $region13: #{clip_model_forward.1} parent=1 // pred_fallthru
      _
    %v22 = vld [vmem:[#allocation2] sm:$0xff]
    %v23 = vld [vmem:[#allocation2 + $0x8] sm:$0xff]
    %v24 = vld [vmem:[#allocation2 + $0x10] sm:$0xff]
    %v25 = vld [vmem:[#allocation2 + $0x18] sm:$0xff]
    %v26 = vld [vmem:[#allocation2 + $0x20] sm:$0xff]
    %v27 = vld [vmem:[#allocation2 + $0x28] sm:$0xff]
    %v28 = vld [vmem:[%s0] sm:$0xff]
    %v29 = vld [vmem:[%s0 + $0x8] sm:$0xf]
    %v30 = vld [vmem:[%s0 + $0xc] sm:$0xff]
    %v31 = vld [vmem:[%s0 + $0x14] sm:$0xf]
    %v32 = vld [vmem:[%s0 + $0x18] sm:$0xff]
    %v33 = vld [vmem:[%s0 + $0x20] sm:$0xf]
    %v34 = vld [vmem:[%s0 + $0x24] sm:$0xff]
    %v35 = vld [vmem:[%s0 + $0x2c] sm:$0xf]
    %v36 = vld [vmem:[%s0 + $0x30] sm:$0xff]
    %v37 = vld [vmem:[%s0 + $0x38] sm:$0xf]
    %v38 = vld [vmem:[%s0 + $0x3c] sm:$0xff]
    %v39 = vld [vmem:[%s0 + $0x44] sm:$0xf]
    %v40 = vld [vmem:[%s0 + $0x48] sm:$0xff]
    %v41 = vld [vmem:[%s0 + $0x50] sm:$0xf]
    %v42 = vld [vmem:[%s0 + $0x54] sm:$0xff]
    %v43 = vld [vmem:[%s0 + $0x5c] sm:$0xf]
    %v44 = vunpack.c.l.bf16 %v28
    %v45 = vunpack.c.h.bf16 %v28
    %v46 = vunpack.c.l.bf16 %v29
    %v47 = vunpack.c.l.bf16 %v30
    %v48 = vunpack.c.h.bf16 %v30
    %v49 = vunpack.c.l.bf16 %v31
    %v50 = vunpack.c.l.bf16 %v32
    %v51 = vunpack.c.h.bf16 %v32
    %v52 = vunpack.c.l.bf16 %v33
    %v53 = vunpack.c.l.bf16 %v34
    %v54 = vunpack.c.h.bf16 %v34
    %v55 = vunpack.c.l.bf16 %v35
    %v56 = vunpack.c.l.bf16 %v36
    %v57 = vunpack.c.h.bf16 %v36
    %v58 = vunpack.c.l.bf16 %v37
    %v59 = vunpack.c.l.bf16 %v38
    %v60 = vunpack.c.h.bf16 %v38
    %v61 = vunpack.c.l.bf16 %v39
    %v62 = vunpack.c.l.bf16 %v40
    %v63 = vunpack.c.h.bf16 %v40
    %v64 = vunpack.c.l.bf16 %v41
    %v65 = vunpack.c.l.bf16 %v42
    %v66 = vunpack.c.h.bf16 %v42
    %v67 = vunpack.c.l.bf16 %v43
    %v92 = vcombine.high %v44, %v44
    %v93 = vcombine.high %v45, %v45
    %v94 = vcombine.high %v46, %v46
    %v95 = vcombine.high %v47, %v47
    %v96 = vcombine.high %v48, %v48
    %v97 = vcombine.high %v49, %v49
    %v98 = vcombine.high %v50, %v50
    %v99 = vcombine.high %v51, %v51
    %v100 = vcombine.high %v52, %v52
    %v101 = vcombine.high %v53, %v53
    %v102 = vcombine.high %v54, %v54
    %v103 = vcombine.high %v55, %v55
    %v104 = vcombine.high %v56, %v56
    %v105 = vcombine.high %v57, %v57
    %v106 = vcombine.high %v58, %v58
    %v107 = vcombine.high %v59, %v59
    %v108 = vcombine.high %v60, %v60
    %v109 = vcombine.high %v61, %v61
    %v110 = vcombine.high %v62, %v62
    %v111 = vcombine.high %v63, %v63
    %v112 = vcombine.high %v64, %v64
    %v113 = vcombine.high %v65, %v65
    %v114 = vcombine.high %v66, %v66
    %v115 = vcombine.high %v67, %v67
    %vm140 = vcmask 1043456
    %v141 = vsel %vm140, %v44, 0.0
    %v142 = vrot.slane %v141, 4
    %v143 = vadd.f32 %v141, %v142
    %v144 = vrot.slane %v143, 2
    %v145 = vadd.f32 %v143, %v144
    %v146 = vrot.slane %v145, 1
    %v147 = vadd.f32 %v145, %v146
    %v148 = vsel %vm140, %v92, 0.0
    %v149 = vrot.slane %v148, 4
    %v150 = vadd.f32 %v148, %v149
    %v151 = vrot.slane %v150, 2
    %v152 = vadd.f32 %v150, %v151
    %v153 = vrot.slane %v152, 1
    %v154 = vadd.f32 %v152, %v153
    %v155 = vsel %vm140, %v45, 0.0
    %v156 = vrot.slane %v155, 4
    %v157 = vadd.f32 %v155, %v156
    %v158 = vrot.slane %v157, 2
    %v159 = vadd.f32 %v157, %v158
    %v160 = vrot.slane %v159, 1
    %v161 = vadd.f32 %v159, %v160
    %v162 = vsel %vm140, %v93, 0.0
    %v163 = vrot.slane %v162, 4
    %v164 = vadd.f32 %v162, %v163
    %v165 = vrot.slane %v164, 2
    %v166 = vadd.f32 %v164, %v165
    %v167 = vrot.slane %v166, 1
    %v168 = vadd.f32 %v166, %v167
    %v169 = vsel %vm140, %v46, 0.0
    %v170 = vrot.slane %v169, 4
    %v171 = vadd.f32 %v169, %v170
    %v172 = vrot.slane %v171, 2
    %v173 = vadd.f32 %v171, %v172
    %v174 = vrot.slane %v173, 1
    %v175 = vadd.f32 %v173, %v174
    %v176 = vsel %vm140, %v94, 0.0
    %v177 = vrot.slane %v176, 4
    %v178 = vadd.f32 %v176, %v177
    %v179 = vrot.slane %v178, 2
    %v180 = vadd.f32 %v178, %v179
    %v181 = vrot.slane %v180, 1
    %v182 = vadd.f32 %v180, %v181
    %v183 = vsel %vm140, %v47, 0.0
    %v184 = vrot.slane %v183, 4
    %v185 = vadd.f32 %v183, %v184
    %v186 = vrot.slane %v185, 2
    %v187 = vadd.f32 %v185, %v186
    %v188 = vrot.slane %v187, 1
    %v189 = vadd.f32 %v187, %v188
    %v190 = vsel %vm140, %v95, 0.0
    %v191 = vrot.slane %v190, 4
    %v192 = vadd.f32 %v190, %v191
    %v193 = vrot.slane %v192, 2
    %v194 = vadd.f32 %v192, %v193
    %v195 = vrot.slane %v194, 1
    %v196 = vadd.f32 %v194, %v195
    %v197 = vsel %vm140, %v48, 0.0
    %v198 = vrot.slane %v197, 4
    %v199 = vadd.f32 %v197, %v198
    %v200 = vrot.slane %v199, 2
    %v201 = vadd.f32 %v199, %v200
    %v202 = vrot.slane %v201, 1
    %v203 = vadd.f32 %v201, %v202
    %v204 = vsel %vm140, %v96, 0.0
    %v205 = vrot.slane %v204, 4
    %v206 = vadd.f32 %v204, %v205
    %v207 = vrot.slane %v206, 2
    %v208 = vadd.f32 %v206, %v207
    %v209 = vrot.slane %v208, 1
    %v210 = vadd.f32 %v208, %v209
    %v211 = vsel %vm140, %v49, 0.0
    %v212 = vrot.slane %v211, 4
    %v213 = vadd.f32 %v211, %v212
    %v214 = vrot.slane %v213, 2
    %v215 = vadd.f32 %v213, %v214
    %v216 = vrot.slane %v215, 1
    %v217 = vadd.f32 %v215, %v216
    %v218 = vsel %vm140, %v97, 0.0
    %v219 = vrot.slane %v218, 4
    %v220 = vadd.f32 %v218, %v219
    %v221 = vrot.slane %v220, 2
    %v222 = vadd.f32 %v220, %v221
    %v223 = vrot.slane %v222, 1
    %v224 = vadd.f32 %v222, %v223
    %v225 = vsel %vm140, %v50, 0.0
    %v226 = vrot.slane %v225, 4
    %v227 = vadd.f32 %v225, %v226
    %v228 = vrot.slane %v227, 2
    %v229 = vadd.f32 %v227, %v228
    %v230 = vrot.slane %v229, 1
    %v231 = vadd.f32 %v229, %v230
    %v232 = vsel %vm140, %v98, 0.0
    %v233 = vrot.slane %v232, 4
    %v234 = vadd.f32 %v232, %v233
    %v235 = vrot.slane %v234, 2
    %v236 = vadd.f32 %v234, %v235
    %v237 = vrot.slane %v236, 1
    %v238 = vadd.f32 %v236, %v237
    %v239 = vsel %vm140, %v51, 0.0
    %v240 = vrot.slane %v239, 4
    %v241 = vadd.f32 %v239, %v240
    %v242 = vrot.slane %v241, 2
    %v243 = vadd.f32 %v241, %v242
    %v244 = vrot.slane %v243, 1
    %v245 = vadd.f32 %v243, %v244
    %v246 = vsel %vm140, %v99, 0.0
    %v247 = vrot.slane %v246, 4
    %v248 = vadd.f32 %v246, %v247
    %v249 = vrot.slane %v248, 2
    %v250 = vadd.f32 %v248, %v249
    %v251 = vrot.slane %v250, 1
    %v252 = vadd.f32 %v250, %v251
    %v253 = vsel %vm140, %v52, 0.0
    %v254 = vrot.slane %v253, 4
    %v255 = vadd.f32 %v253, %v254
    %v256 = vrot.slane %v255, 2
    %v257 = vadd.f32 %v255, %v256
    %v258 = vrot.slane %v257, 1
    %v259 = vadd.f32 %v257, %v258
    %v260 = vsel %vm140, %v100, 0.0
    %v261 = vrot.slane %v260, 4
    %v262 = vadd.f32 %v260, %v261
    %v263 = vrot.slane %v262, 2
    %v264 = vadd.f32 %v262, %v263
    %v265 = vrot.slane %v264, 1
    %v266 = vadd.f32 %v264, %v265
    %v267 = vsel %vm140, %v53, 0.0
    %v268 = vrot.slane %v267, 4
    %v269 = vadd.f32 %v267, %v268
    %v270 = vrot.slane %v269, 2
    %v271 = vadd.f32 %v269, %v270
    %v272 = vrot.slane %v271, 1
    %v273 = vadd.f32 %v271, %v272
    %v274 = vsel %vm140, %v101, 0.0
    %v275 = vrot.slane %v274, 4
    %v276 = vadd.f32 %v274, %v275
    %v277 = vrot.slane %v276, 2
    %v278 = vadd.f32 %v276, %v277
    %v279 = vrot.slane %v278, 1
    %v280 = vadd.f32 %v278, %v279
    %v281 = vsel %vm140, %v54, 0.0
    %v282 = vrot.slane %v281, 4
    %v283 = vadd.f32 %v281, %v282
    %v284 = vrot.slane %v283, 2
    %v285 = vadd.f32 %v283, %v284
    %v286 = vrot.slane %v285, 1
    %v287 = vadd.f32 %v285, %v286
    %v288 = vsel %vm140, %v102, 0.0
    %v289 = vrot.slane %v288, 4
    %v290 = vadd.f32 %v288, %v289
    %v291 = vrot.slane %v290, 2
    %v292 = vadd.f32 %v290, %v291
    %v293 = vrot.slane %v292, 1
    %v294 = vadd.f32 %v292, %v293
    %v295 = vsel %vm140, %v55, 0.0
    %v296 = vrot.slane %v295, 4
    %v297 = vadd.f32 %v295, %v296
    %v298 = vrot.slane %v297, 2
    %v299 = vadd.f32 %v297, %v298
    %v300 = vrot.slane %v299, 1
    %v301 = vadd.f32 %v299, %v300
    %v302 = vsel %vm140, %v103, 0.0
    %v303 = vrot.slane %v302, 4
    %v304 = vadd.f32 %v302, %v303
    %v305 = vrot.slane %v304, 2
    %v306 = vadd.f32 %v304, %v305
    %v307 = vrot.slane %v306, 1
    %v308 = vadd.f32 %v306, %v307
    %v309 = vsel %vm140, %v56, 0.0
    %v310 = vrot.slane %v309, 4
    %v311 = vadd.f32 %v309, %v310
    %v312 = vrot.slane %v311, 2
    %v313 = vadd.f32 %v311, %v312
    %v314 = vrot.slane %v313, 1
    %v315 = vadd.f32 %v313, %v314
    %v316 = vsel %vm140, %v104, 0.0
    %v317 = vrot.slane %v316, 4
    %v318 = vadd.f32 %v316, %v317
    %v319 = vrot.slane %v318, 2
    %v320 = vadd.f32 %v318, %v319
    %v321 = vrot.slane %v320, 1
    %v322 = vadd.f32 %v320, %v321
    %v323 = vsel %vm140, %v57, 0.0
    %v324 = vrot.slane %v323, 4
    %v325 = vadd.f32 %v323, %v324
    %v326 = vrot.slane %v325, 2
    %v327 = vadd.f32 %v325, %v326
    %v328 = vrot.slane %v327, 1
    %v329 = vadd.f32 %v327, %v328
    %v330 = vsel %vm140, %v105, 0.0
    %v331 = vrot.slane %v330, 4
    %v332 = vadd.f32 %v330, %v331
    %v333 = vrot.slane %v332, 2
    %v334 = vadd.f32 %v332, %v333
    %v335 = vrot.slane %v334, 1
    %v336 = vadd.f32 %v334, %v335
    %v337 = vsel %vm140, %v58, 0.0
    %v338 = vrot.slane %v337, 4
    %v339 = vadd.f32 %v337, %v338
    %v340 = vrot.slane %v339, 2
    %v341 = vadd.f32 %v339, %v340
    %v342 = vrot.slane %v341, 1
    %v343 = vadd.f32 %v341, %v342
    %v344 = vsel %vm140, %v106, 0.0
    %v345 = vrot.slane %v344, 4
    %v346 = vadd.f32 %v344, %v345
    %v347 = vrot.slane %v346, 2
    %v348 = vadd.f32 %v346, %v347
    %v349 = vrot.slane %v348, 1
    %v350 = vadd.f32 %v348, %v349
    %v351 = vsel %vm140, %v59, 0.0
    %v352 = vrot.slane %v351, 4
    %v353 = vadd.f32 %v351, %v352
    %v354 = vrot.slane %v353, 2
    %v355 = vadd.f32 %v353, %v354
    %v356 = vrot.slane %v355, 1
    %v357 = vadd.f32 %v355, %v356
    %v358 = vsel %vm140, %v107, 0.0
    %v359 = vrot.slane %v358, 4
    %v360 = vadd.f32 %v358, %v359
    %v361 = vrot.slane %v360, 2
    %v362 = vadd.f32 %v360, %v361
    %v363 = vrot.slane %v362, 1
    %v364 = vadd.f32 %v362, %v363
    %v365 = vsel %vm140, %v60, 0.0
    %v366 = vrot.slane %v365, 4
    %v367 = vadd.f32 %v365, %v366
    %v368 = vrot.slane %v367, 2
    %v369 = vadd.f32 %v367, %v368
    %v370 = vrot.slane %v369, 1
    %v371 = vadd.f32 %v369, %v370
    %v372 = vsel %vm140, %v108, 0.0
    %v373 = vrot.slane %v372, 4
    %v374 = vadd.f32 %v372, %v373
    %v375 = vrot.slane %v374, 2
    %v376 = vadd.f32 %v374, %v375
    %v377 = vrot.slane %v376, 1
    %v378 = vadd.f32 %v376, %v377
    %v379 = vsel %vm140, %v61, 0.0
    %v380 = vrot.slane %v379, 4
    %v381 = vadd.f32 %v379, %v380
    %v382 = vrot.slane %v381, 2
    %v383 = vadd.f32 %v381, %v382
    %v384 = vrot.slane %v383, 1
    %v385 = vadd.f32 %v383, %v384
    %v386 = vsel %vm140, %v109, 0.0
    %v387 = vrot.slane %v386, 4
    %v388 = vadd.f32 %v386, %v387
    %v389 = vrot.slane %v388, 2
    %v390 = vadd.f32 %v388, %v389
    %v391 = vrot.slane %v390, 1
    %v392 = vadd.f32 %v390, %v391
    %v393 = vsel %vm140, %v62, 0.0
    %v394 = vrot.slane %v393, 4
    %v395 = vadd.f32 %v393, %v394
    %v396 = vrot.slane %v395, 2
    %v397 = vadd.f32 %v395, %v396
    %v398 = vrot.slane %v397, 1
    %v399 = vadd.f32 %v397, %v398
    %v400 = vsel %vm140, %v110, 0.0
    %v401 = vrot.slane %v400, 4
    %v402 = vadd.f32 %v400, %v401
    %v403 = vrot.slane %v402, 2
    %v404 = vadd.f32 %v402, %v403
    %v405 = vrot.slane %v404, 1
    %v406 = vadd.f32 %v404, %v405
    %v407 = vsel %vm140, %v63, 0.0
    %v408 = vrot.slane %v407, 4
    %v409 = vadd.f32 %v407, %v408
    %v410 = vrot.slane %v409, 2
    %v411 = vadd.f32 %v409, %v410
    %v412 = vrot.slane %v411, 1
    %v413 = vadd.f32 %v411, %v412
    %v414 = vsel %vm140, %v111, 0.0
    %v415 = vrot.slane %v414, 4
    %v416 = vadd.f32 %v414, %v415
    %v417 = vrot.slane %v416, 2
    %v418 = vadd.f32 %v416, %v417
    %v419 = vrot.slane %v418, 1
    %v420 = vadd.f32 %v418, %v419
    %v421 = vsel %vm140, %v64, 0.0
    %v422 = vrot.slane %v421, 4
    %v423 = vadd.f32 %v421, %v422
    %v424 = vrot.slane %v423, 2
    %v425 = vadd.f32 %v423, %v424
    %v426 = vrot.slane %v425, 1
    %v427 = vadd.f32 %v425, %v426
    %v428 = vsel %vm140, %v112, 0.0
    %v429 = vrot.slane %v428, 4
    %v430 = vadd.f32 %v428, %v429
    %v431 = vrot.slane %v430, 2
    %v432 = vadd.f32 %v430, %v431
    %v433 = vrot.slane %v432, 1
    %v434 = vadd.f32 %v432, %v433
    %v435 = vsel %vm140, %v65, 0.0
    %v436 = vrot.slane %v435, 4
    %v437 = vadd.f32 %v435, %v436
    %v438 = vrot.slane %v437, 2
    %v439 = vadd.f32 %v437, %v438
    %v440 = vrot.slane %v439, 1
    %v441 = vadd.f32 %v439, %v440
    %v442 = vsel %vm140, %v113, 0.0
    %v443 = vrot.slane %v442, 4
    %v444 = vadd.f32 %v442, %v443
    %v445 = vrot.slane %v444, 2
    %v446 = vadd.f32 %v444, %v445
    %v447 = vrot.slane %v446, 1
    %v448 = vadd.f32 %v446, %v447
    %v449 = vsel %vm140, %v66, 0.0
    %v450 = vrot.slane %v449, 4
    %v451 = vadd.f32 %v449, %v450
    %v452 = vrot.slane %v451, 2
    %v453 = vadd.f32 %v451, %v452
    %v454 = vrot.slane %v453, 1
    %v455 = vadd.f32 %v453, %v454
    %v456 = vsel %vm140, %v114, 0.0
    %v457 = vrot.slane %v456, 4
    %v458 = vadd.f32 %v456, %v457
    %v459 = vrot.slane %v458, 2
    %v460 = vadd.f32 %v458, %v459
    %v461 = vrot.slane %v460, 1
    %v462 = vadd.f32 %v460, %v461
    %v463 = vsel %vm140, %v67, 0.0
    %v464 = vrot.slane %v463, 4
    %v465 = vadd.f32 %v463, %v464
    %v466 = vrot.slane %v465, 2
    %v467 = vadd.f32 %v465, %v466
    %v468 = vrot.slane %v467, 1
    %v469 = vadd.f32 %v467, %v468
    %v470 = vsel %vm140, %v115, 0.0
    %v471 = vrot.slane %v470, 4
    %v472 = vadd.f32 %v470, %v471
    %v473 = vrot.slane %v472, 2
    %v474 = vadd.f32 %v472, %v473
    %v475 = vrot.slane %v474, 1
    %v476 = vadd.f32 %v474, %v475
    %vm525 = vcmask 1041409
    %v526 = vsel %vm525, %v189, %v147
    %vm527 = vcmask 1042434
    %v528 = vsel %vm527, %v231, %v526
    %vm529 = vcmask 1043459
    %v530 = vsel %vm529, %v273, %v528
    %vm531 = vcmask 1044484
    %v532 = vsel %vm531, %v315, %v530
    %vm533 = vcmask 1045509
    %v534 = vsel %vm533, %v357, %v532
    %vm535 = vcmask 1046534
    %v536 = vsel %vm535, %v399, %v534
    %vm537 = vcmask 1047559
    %v538 = vsel %vm537, %v441, %v536
    %v539 = vsel %vm525, %v196, %v154
    %v540 = vsel %vm527, %v238, %v539
    %v541 = vsel %vm529, %v280, %v540
    %v542 = vsel %vm531, %v322, %v541
    %v543 = vsel %vm533, %v364, %v542
    %v544 = vsel %vm535, %v406, %v543
    %v545 = vsel %vm537, %v448, %v544
    %v546 = vsel %vm525, %v203, %v161
    %v547 = vsel %vm527, %v245, %v546
    %v548 = vsel %vm529, %v287, %v547
    %v549 = vsel %vm531, %v329, %v548
    %v550 = vsel %vm533, %v371, %v549
    %v551 = vsel %vm535, %v413, %v550
    %v552 = vsel %vm537, %v455, %v551
    %v553 = vsel %vm525, %v210, %v168
    %v554 = vsel %vm527, %v252, %v553
    %v555 = vsel %vm529, %v294, %v554
    %v556 = vsel %vm531, %v336, %v555
    %v557 = vsel %vm533, %v378, %v556
    %v558 = vsel %vm535, %v420, %v557
    %v559 = vsel %vm537, %v462, %v558
    %v560 = vsel %vm525, %v217, %v175
    %v561 = vsel %vm527, %v259, %v560
    %v562 = vsel %vm529, %v301, %v561
    %v563 = vsel %vm531, %v343, %v562
    %v564 = vsel %vm533, %v385, %v563
    %v565 = vsel %vm535, %v427, %v564
    %v566 = vsel %vm537, %v469, %v565
    %v567 = vsel %vm525, %v224, %v182
    %v568 = vsel %vm527, %v266, %v567
    %v569 = vsel %vm529, %v308, %v568
    %v570 = vsel %vm531, %v350, %v569
    %v571 = vsel %vm533, %v392, %v570
    %v572 = vsel %vm535, %v434, %v571
    %v573 = vsel %vm537, %v476, %v572
    %v580 = vadd.f32 %v22, %v538
    %v581 = vadd.f32 %v23, %v545
    %v582 = vadd.f32 %v24, %v552
    %v583 = vadd.f32 %v25, %v559
    %v584 = vadd.f32 %v26, %v566
    %v585 = vadd.f32 %v27, %v573
    %586 = vst [vmem:[#allocation2] sm:$0xff] %v580
    %587 = vst [vmem:[#allocation2 + $0x8] sm:$0xff] %v581
    %588 = vst [vmem:[#allocation2 + $0x10] sm:$0xff] %v582
    %589 = vst [vmem:[#allocation2 + $0x18] sm:$0xff] %v583
    %590 = vst [vmem:[#allocation2 + $0x20] sm:$0xff] %v584
    %591 = vst [vmem:[#allocation2 + $0x28] sm:$0xff] %v585
    // Predicated region
    $region14: #{clip_model_forward.1} parent=1 // pred_check
      %p592 = pneg %p12
    $region15: #{clip_model_forward.1} parent=1 // pred_check_branch
      %594 = sbr.rel (%p592) target = $region17
    $region16: #{clip_model_forward.1} parent=1 // pred_region
      %v595 = vld [vmem:[#allocation2] sm:$0xff]
      %v596 = vld [vmem:[#allocation2 + $0x8] sm:$0xff]
      %v597 = vld [vmem:[#allocation2 + $0x10] sm:$0xff]
      %v598 = vld [vmem:[#allocation2 + $0x18] sm:$0xff]
      %v599 = vld [vmem:[#allocation2 + $0x20] sm:$0xff]
      %v600 = vld [vmem:[#allocation2 + $0x28] sm:$0xff]
      %v601 = vpack.c.bf16 %v595, %v595
      %v602 = vpack.c.bf16 %v596, %v596
      %v603 = vpack.c.bf16 %v597, %v597
      %v604 = vpack.c.bf16 %v598, %v598
      %v605 = vpack.c.bf16 %v599, %v599
      %v606 = vpack.c.bf16 %v600, %v600
      %v607 = vld [vmem:[%s1] sm:$0xff]
      %v608 = vld [vmem:[%s1 + $0x8] sm:$0xff]
      %v609 = vld [vmem:[%s1 + $0x10] sm:$0xff]
      %v610 = vld [vmem:[%s1 + $0x18] sm:$0xff]
      %v611 = vld [vmem:[%s1 + $0x20] sm:$0xff]
      %v612 = vld [vmem:[%s1 + $0x28] sm:$0xff]
      %v613 = vld [vmem:[%s1 + $0x30] sm:$0xff]
      %v614 = vld [vmem:[%s1 + $0x38] sm:$0xff]
      %v615 = vld [vmem:[%s1 + $0x40] sm:$0xff]
      %v616 = vld [vmem:[%s1 + $0x48] sm:$0xff]
      %v617 = vld [vmem:[%s1 + $0x50] sm:$0xff]
      %v618 = vld [vmem:[%s1 + $0x58] sm:$0xff]
      %v619 = vld [vmem:[%s1 + $0x60] sm:$0xff]
      %v620 = vld [vmem:[%s1 + $0x68] sm:$0xff]
      %v621 = vld [vmem:[%s1 + $0x70] sm:$0xff]
      %v622 = vld [vmem:[%s1 + $0x78] sm:$0xff]
      %v623 = vld [vmem:[%s1 + $0x80] sm:$0xff]
      %v624 = vld [vmem:[%s1 + $0x88] sm:$0xff]
      %v625 = vld [vmem:[%s1 + $0x90] sm:$0xff]
      %v626 = vld [vmem:[%s1 + $0x98] sm:$0xff]
      %v627 = vld [vmem:[%s1 + $0xa0] sm:$0xff]
      %v628 = vld [vmem:[%s1 + $0xa8] sm:$0xff]
      %v629 = vld [vmem:[%s1 + $0xb0] sm:$0xff]
      %v630 = vld [vmem:[%s1 + $0xb8] sm:$0xff]
      %v631 = vld [vmem:[%s1 + $0xc0] sm:$0xff]
      %v632 = vld [vmem:[%s1 + $0xc8] sm:$0xff]
      %v633 = vld [vmem:[%s1 + $0xd0] sm:$0xff]
      %v634 = vld [vmem:[%s1 + $0xd8] sm:$0xff]
      %v635 = vld [vmem:[%s1 + $0xe0] sm:$0xff]
      %v636 = vld [vmem:[%s1 + $0xe8] sm:$0xff]
      %v637 = vld [vmem:[%s1 + $0xf0] sm:$0xff]
      %v638 = vld [vmem:[%s1 + $0xf8] sm:$0xff]
      %v639 = vld [vmem:[%s1 + $0x100] sm:$0xff]
      %v640 = vld [vmem:[%s1 + $0x108] sm:$0xff]
      %v641 = vld [vmem:[%s1 + $0x110] sm:$0xff]
      %v642 = vld [vmem:[%s1 + $0x118] sm:$0xff]
      %v643 = vld [vmem:[%s1 + $0x120] sm:$0xff]
      %v644 = vld [vmem:[%s1 + $0x128] sm:$0xff]
      %v645 = vld [vmem:[%s1 + $0x130] sm:$0xff]
      %v646 = vld [vmem:[%s1 + $0x138] sm:$0xff]
      %v647 = vld [vmem:[%s1 + $0x140] sm:$0xff]
      %v648 = vld [vmem:[%s1 + $0x148] sm:$0xff]
      %v649 = vld [vmem:[%s1 + $0x150] sm:$0xff]
      %v650 = vld [vmem:[%s1 + $0x158] sm:$0xff]
      %v651 = vld [vmem:[%s1 + $0x160] sm:$0xff]
      %v652 = vld [vmem:[%s1 + $0x168] sm:$0xff]
      %v653 = vld [vmem:[%s1 + $0x170] sm:$0xff]
      %v654 = vld [vmem:[%s1 + $0x178] sm:$0xff]
      %v655 = vld [vmem:[%s1 + $0x180] sm:$0xff]
      %v656 = vld [vmem:[%s1 + $0x188] sm:$0xff]
      %v657 = vld [vmem:[%s1 + $0x190] sm:$0xff]
      %v658 = vld [vmem:[%s1 + $0x198] sm:$0xff]
      %v659 = vld [vmem:[%s1 + $0x1a0] sm:$0xff]
      %v660 = vld [vmem:[%s1 + $0x1a8] sm:$0xff]
      %v661 = vld [vmem:[%s1 + $0x1b0] sm:$0xff]
      %v662 = vld [vmem:[%s1 + $0x1b8] sm:$0xff]
      %v663 = vld [vmem:[%s1 + $0x1c0] sm:$0xff]
      %v664 = vld [vmem:[%s1 + $0x1c8] sm:$0xff]
      %v665 = vld [vmem:[%s1 + $0x1d0] sm:$0xff]
      %v666 = vld [vmem:[%s1 + $0x1d8] sm:$0xff]
      %v667 = vld [vmem:[%s1 + $0x1e0] sm:$0xff]
      %v668 = vld [vmem:[%s1 + $0x1e8] sm:$0xff]
      %v669 = vld [vmem:[%s1 + $0x1f0] sm:$0xff]
      %v670 = vld [vmem:[%s1 + $0x1f8] sm:$0xff]
      %v671 = vld [vmem:[%s1 + $0x200] sm:$0xff]
      %v672 = vld [vmem:[%s1 + $0x208] sm:$0xff]
      %v673 = vld [vmem:[%s1 + $0x210] sm:$0xff]
      %v674 = vld [vmem:[%s1 + $0x218] sm:$0xff]
      %v675 = vld [vmem:[%s1 + $0x220] sm:$0xff]
      %v676 = vld [vmem:[%s1 + $0x228] sm:$0xff]
      %v677 = vld [vmem:[%s1 + $0x230] sm:$0xff]
      %v678 = vld [vmem:[%s1 + $0x238] sm:$0xff]
      %v679 = vld [vmem:[%s1 + $0x240] sm:$0xff]
      %v680 = vld [vmem:[%s1 + $0x248] sm:$0xff]
      %v681 = vld [vmem:[%s1 + $0x250] sm:$0xff]
      %v682 = vld [vmem:[%s1 + $0x258] sm:$0xff]
      %v683 = vld [vmem:[%s1 + $0x260] sm:$0xff]
      %v684 = vld [vmem:[%s1 + $0x268] sm:$0xff]
      %v685 = vld [vmem:[%s1 + $0x270] sm:$0xff]
      %v686 = vld [vmem:[%s1 + $0x278] sm:$0xff]
      %v687 = vld [vmem:[%s1 + $0x280] sm:$0xff]
      %v688 = vld [vmem:[%s1 + $0x288] sm:$0xff]
      %v689 = vld [vmem:[%s1 + $0x290] sm:$0xff]
      %v690 = vld [vmem:[%s1 + $0x298] sm:$0xff]
      %v691 = vld [vmem:[%s1 + $0x2a0] sm:$0xff]
      %v692 = vld [vmem:[%s1 + $0x2a8] sm:$0xff]
      %v693 = vld [vmem:[%s1 + $0x2b0] sm:$0xff]
      %v694 = vld [vmem:[%s1 + $0x2b8] sm:$0xff]
      %v695 = vld [vmem:[%s1 + $0x2c0] sm:$0xff]
      %v696 = vld [vmem:[%s1 + $0x2c8] sm:$0xff]
      %v697 = vld [vmem:[%s1 + $0x2d0] sm:$0xff]
      %v698 = vld [vmem:[%s1 + $0x2d8] sm:$0xff]
      %v699 = vld [vmem:[%s1 + $0x2e0] sm:$0xff]
      %v700 = vld [vmem:[%s1 + $0x2e8] sm:$0xff]
      %v701 = vld [vmem:[%s1 + $0x2f0] sm:$0xff]
      %v702 = vld [vmem:[%s1 + $0x2f8] sm:$0xff]
      %v703 = vld [vmem:[%s1 + $0x300] sm:$0xff]
      %v704 = vld [vmem:[%s1 + $0x308] sm:$0xff]
      %v705 = vld [vmem:[%s1 + $0x310] sm:$0xff]
      %v706 = vld [vmem:[%s1 + $0x318] sm:$0xff]
      %v707 = vld [vmem:[%s1 + $0x320] sm:$0xff]
      %v708 = vld [vmem:[%s1 + $0x328] sm:$0xff]
      %v709 = vld [vmem:[%s1 + $0x330] sm:$0xff]
      %v710 = vld [vmem:[%s1 + $0x338] sm:$0xff]
      %v711 = vld [vmem:[%s1 + $0x340] sm:$0xff]
      %v712 = vld [vmem:[%s1 + $0x348] sm:$0xff]
      %v713 = vld [vmem:[%s1 + $0x350] sm:$0xff]
      %v714 = vld [vmem:[%s1 + $0x358] sm:$0xff]
      %v715 = vld [vmem:[%s1 + $0x360] sm:$0xff]
      %v716 = vld [vmem:[%s1 + $0x368] sm:$0xff]
      %v717 = vld [vmem:[%s1 + $0x370] sm:$0xff]
      %v718 = vld [vmem:[%s1 + $0x378] sm:$0xff]
      %v719 = vld [vmem:[%s1 + $0x380] sm:$0xff]
      %v720 = vld [vmem:[%s1 + $0x388] sm:$0xff]
      %v721 = vld [vmem:[%s1 + $0x390] sm:$0xff]
      %v722 = vld [vmem:[%s1 + $0x398] sm:$0xff]
      %v723 = vld [vmem:[%s1 + $0x3a0] sm:$0xff]
      %v724 = vld [vmem:[%s1 + $0x3a8] sm:$0xff]
      %v725 = vld [vmem:[%s1 + $0x3b0] sm:$0xff]
      %v726 = vld [vmem:[%s1 + $0x3b8] sm:$0xff]
      %v727 = vld [vmem:[%s1 + $0x3c0] sm:$0xff]
      %v728 = vld [vmem:[%s1 + $0x3c8] sm:$0xff]
      %v729 = vld [vmem:[%s1 + $0x3d0] sm:$0xff]
      %v730 = vld [vmem:[%s1 + $0x3d8] sm:$0xff]
      %v731 = vld [vmem:[%s1 + $0x3e0] sm:$0xff]
      %v732 = vld [vmem:[%s1 + $0x3e8] sm:$0xff]
      %v733 = vld [vmem:[%s1 + $0x3f0] sm:$0xff]
      %v734 = vld [vmem:[%s1 + $0x3f8] sm:$0xff]
      %v735 = vld [vmem:[%s1 + $0x400] sm:$0xff]
      %v736 = vld [vmem:[%s1 + $0x408] sm:$0xff]
      %v737 = vld [vmem:[%s1 + $0x410] sm:$0xff]
      %v738 = vld [vmem:[%s1 + $0x418] sm:$0xff]
      %v739 = vld [vmem:[%s1 + $0x420] sm:$0xff]
      %v740 = vld [vmem:[%s1 + $0x428] sm:$0xff]
      %v741 = vld [vmem:[%s1 + $0x430] sm:$0xff]
      %v742 = vld [vmem:[%s1 + $0x438] sm:$0xff]
      %v743 = vld [vmem:[%s1 + $0x440] sm:$0xff]
      %v744 = vld [vmem:[%s1 + $0x448] sm:$0xff]
      %v745 = vld [vmem:[%s1 + $0x450] sm:$0xff]
      %v746 = vld [vmem:[%s1 + $0x458] sm:$0xff]
      %v747 = vld [vmem:[%s1 + $0x460] sm:$0xff]
      %v748 = vld [vmem:[%s1 + $0x468] sm:$0xff]
      %v749 = vld [vmem:[%s1 + $0x470] sm:$0xff]
      %v750 = vld [vmem:[%s1 + $0x478] sm:$0xff]
      %v751 = vld [vmem:[%s1 + $0x480] sm:$0xff]
      %v752 = vld [vmem:[%s1 + $0x488] sm:$0xff]
      %v753 = vld [vmem:[%s1 + $0x490] sm:$0xff]
      %v754 = vld [vmem:[%s1 + $0x498] sm:$0xff]
      %v755 = vld [vmem:[%s1 + $0x4a0] sm:$0xff]
      %v756 = vld [vmem:[%s1 + $0x4a8] sm:$0xff]
      %v757 = vld [vmem:[%s1 + $0x4b0] sm:$0xff]
      %v758 = vld [vmem:[%s1 + $0x4b8] sm:$0xff]
      %v759 = vld [vmem:[%s1 + $0x4c0] sm:$0xff]
      %v760 = vld [vmem:[%s1 + $0x4c8] sm:$0xff]
      %v761 = vld [vmem:[%s1 + $0x4d0] sm:$0xff]
      %v762 = vld [vmem:[%s1 + $0x4d8] sm:$0xff]
      %v763 = vld [vmem:[%s1 + $0x4e0] sm:$0xff]
      %v764 = vld [vmem:[%s1 + $0x4e8] sm:$0xff]
      %v765 = vld [vmem:[%s1 + $0x4f0] sm:$0xff]
      %v766 = vld [vmem:[%s1 + $0x4f8] sm:$0xff]
      %v767 = vld [vmem:[%s1 + $0x500] sm:$0xff]
      %v768 = vld [vmem:[%s1 + $0x508] sm:$0xff]
      %v769 = vld [vmem:[%s1 + $0x510] sm:$0xff]
      %v770 = vld [vmem:[%s1 + $0x518] sm:$0xff]
      %v771 = vld [vmem:[%s1 + $0x520] sm:$0xff]
      %v772 = vld [vmem:[%s1 + $0x528] sm:$0xff]
      %v773 = vld [vmem:[%s1 + $0x530] sm:$0xff]
      %v774 = vld [vmem:[%s1 + $0x538] sm:$0xff]
      %v775 = vld [vmem:[%s1 + $0x540] sm:$0xff]
      %v776 = vld [vmem:[%s1 + $0x548] sm:$0xff]
      %v777 = vld [vmem:[%s1 + $0x550] sm:$0xff]
      %v778 = vld [vmem:[%s1 + $0x558] sm:$0xff]
      %v779 = vld [vmem:[%s1 + $0x560] sm:$0xff]
      %v780 = vld [vmem:[%s1 + $0x568] sm:$0xff]
      %v781 = vld [vmem:[%s1 + $0x570] sm:$0xff]
      %v782 = vld [vmem:[%s1 + $0x578] sm:$0xff]
      %v783 = vld [vmem:[%s1 + $0x580] sm:$0xff]
      %v784 = vld [vmem:[%s1 + $0x588] sm:$0xff]
      %v785 = vld [vmem:[%s1 + $0x590] sm:$0xff]
      %v786 = vld [vmem:[%s1 + $0x598] sm:$0xff]
      %v787 = vld [vmem:[%s1 + $0x5a0] sm:$0xff]
      %v788 = vld [vmem:[%s1 + $0x5a8] sm:$0xff]
      %v789 = vld [vmem:[%s1 + $0x5b0] sm:$0xff]
      %v790 = vld [vmem:[%s1 + $0x5b8] sm:$0xff]
      %v791 = vld [vmem:[%s1 + $0x5c0] sm:$0xff]
      %v792 = vld [vmem:[%s1 + $0x5c8] sm:$0xff]
      %v793 = vld [vmem:[%s1 + $0x5d0] sm:$0xff]
      %v794 = vld [vmem:[%s1 + $0x5d8] sm:$0xff]
      %v795 = vld [vmem:[%s1 + $0x5e0] sm:$0xff]
      %v796 = vld [vmem:[%s1 + $0x5e8] sm:$0xff]
      %v797 = vld [vmem:[%s1 + $0x5f0] sm:$0xff]
      %v798 = vld [vmem:[%s1 + $0x5f8] sm:$0xff]
      %v991 = vunpack.c.l.b16 %v607
      %v992 = vunpack.c.h.b16 %v607
      %v993 = vunpack.c.l.b16 %v608
      %v994 = vunpack.c.h.b16 %v608
      %v995 = vunpack.c.l.b16 %v609
      %v996 = vunpack.c.h.b16 %v609
      %v997 = vunpack.c.l.b16 %v610
      %v998 = vunpack.c.h.b16 %v610
      %v999 = vunpack.c.l.b16 %v611
      %v1000 = vunpack.c.h.b16 %v611
      %v1001 = vunpack.c.l.b16 %v612
      %v1002 = vunpack.c.h.b16 %v612
      %v1003 = vunpack.c.l.b16 %v613
      %v1004 = vunpack.c.h.b16 %v613
      %v1005 = vunpack.c.l.b16 %v614
      %v1006 = vunpack.c.h.b16 %v614
      %v1007 = vunpack.c.l.b16 %v615
      %v1008 = vunpack.c.h.b16 %v615
      %v1009 = vunpack.c.l.b16 %v616
      %v1010 = vunpack.c.h.b16 %v616
      %v1011 = vunpack.c.l.b16 %v617
      %v1012 = vunpack.c.h.b16 %v617
      %v1013 = vunpack.c.l.b16 %v618
      %v1014 = vunpack.c.h.b16 %v618
      %v1015 = vunpack.c.l.b16 %v619
      %v1016 = vunpack.c.h.b16 %v619
      %v1017 = vunpack.c.l.b16 %v620
      %v1018 = vunpack.c.h.b16 %v620
      %v1019 = vunpack.c.l.b16 %v621
      %v1020 = vunpack.c.h.b16 %v621
      %v1021 = vunpack.c.l.b16 %v622
      %v1022 = vunpack.c.h.b16 %v622
      %v1023 = vunpack.c.l.b16 %v623
      %v1024 = vunpack.c.h.b16 %v623
      %v1025 = vunpack.c.l.b16 %v624
      %v1026 = vunpack.c.h.b16 %v624
      %v1027 = vunpack.c.l.b16 %v625
      %v1028 = vunpack.c.h.b16 %v625
      %v1029 = vunpack.c.l.b16 %v626
      %v1030 = vunpack.c.h.b16 %v626
      %v1031 = vunpack.c.l.b16 %v627
      %v1032 = vunpack.c.h.b16 %v627
      %v1033 = vunpack.c.l.b16 %v628
      %v1034 = vunpack.c.h.b16 %v628
      %v1035 = vunpack.c.l.b16 %v629
      %v1036 = vunpack.c.h.b16 %v629
      %v1037 = vunpack.c.l.b16 %v630
      %v1038 = vunpack.c.h.b16 %v630
      %v1039 = vunpack.c.l.b16 %v631
      %v1040 = vunpack.c.h.b16 %v631
      %v1041 = vunpack.c.l.b16 %v632
      %v1042 = vunpack.c.h.b16 %v632
      %v1043 = vunpack.c.l.b16 %v633
      %v1044 = vunpack.c.h.b16 %v633
      %v1045 = vunpack.c.l.b16 %v634
      %v1046 = vunpack.c.h.b16 %v634
      %v1047 = vunpack.c.l.b16 %v635
      %v1048 = vunpack.c.h.b16 %v635
      %v1049 = vunpack.c.l.b16 %v636
      %v1050 = vunpack.c.h.b16 %v636
      %v1051 = vunpack.c.l.b16 %v637
      %v1052 = vunpack.c.h.b16 %v637
      %v1053 = vunpack.c.l.b16 %v638
      %v1054 = vunpack.c.h.b16 %v638
      %v1055 = vunpack.c.l.b16 %v639
      %v1056 = vunpack.c.h.b16 %v639
      %v1057 = vunpack.c.l.b16 %v640
      %v1058 = vunpack.c.h.b16 %v640
      %v1059 = vunpack.c.l.b16 %v641
      %v1060 = vunpack.c.h.b16 %v641
      %v1061 = vunpack.c.l.b16 %v642
      %v1062 = vunpack.c.h.b16 %v642
      %v1063 = vunpack.c.l.b16 %v643
      %v1064 = vunpack.c.h.b16 %v643
      %v1065 = vunpack.c.l.b16 %v644
      %v1066 = vunpack.c.h.b16 %v644
      %v1067 = vunpack.c.l.b16 %v645
      %v1068 = vunpack.c.h.b16 %v645
      %v1069 = vunpack.c.l.b16 %v646
      %v1070 = vunpack.c.h.b16 %v646
      %v1071 = vunpack.c.l.b16 %v647
      %v1072 = vunpack.c.h.b16 %v647
      %v1073 = vunpack.c.l.b16 %v648
      %v1074 = vunpack.c.h.b16 %v648
      %v1075 = vunpack.c.l.b16 %v649
      %v1076 = vunpack.c.h.b16 %v649
      %v1077 = vunpack.c.l.b16 %v650
      %v1078 = vunpack.c.h.b16 %v650
      %v1079 = vunpack.c.l.b16 %v651
      %v1080 = vunpack.c.h.b16 %v651
      %v1081 = vunpack.c.l.b16 %v652
      %v1082 = vunpack.c.h.b16 %v652
      %v1083 = vunpack.c.l.b16 %v653
      %v1084 = vunpack.c.h.b16 %v653
      %v1085 = vunpack.c.l.b16 %v654
      %v1086 = vunpack.c.h.b16 %v654
      %v1087 = vunpack.c.l.b16 %v655
      %v1088 = vunpack.c.h.b16 %v655
      %v1089 = vunpack.c.l.b16 %v656
      %v1090 = vunpack.c.h.b16 %v656
      %v1091 = vunpack.c.l.b16 %v657
      %v1092 = vunpack.c.h.b16 %v657
      %v1093 = vunpack.c.l.b16 %v658
      %v1094 = vunpack.c.h.b16 %v658
      %v1095 = vunpack.c.l.b16 %v659
      %v1096 = vunpack.c.h.b16 %v659
      %v1097 = vunpack.c.l.b16 %v660
      %v1098 = vunpack.c.h.b16 %v660
      %v1099 = vunpack.c.l.b16 %v661
      %v1100 = vunpack.c.h.b16 %v661
      %v1101 = vunpack.c.l.b16 %v662
      %v1102 = vunpack.c.h.b16 %v662
      %v1103 = vunpack.c.l.b16 %v663
      %v1104 = vunpack.c.h.b16 %v663
      %v1105 = vunpack.c.l.b16 %v664
      %v1106 = vunpack.c.h.b16 %v664
      %v1107 = vunpack.c.l.b16 %v665
      %v1108 = vunpack.c.h.b16 %v665
      %v1109 = vunpack.c.l.b16 %v666
      %v1110 = vunpack.c.h.b16 %v666
      %v1111 = vunpack.c.l.b16 %v667
      %v1112 = vunpack.c.h.b16 %v667
      %v1113 = vunpack.c.l.b16 %v668
      %v1114 = vunpack.c.h.b16 %v668
      %v1115 = vunpack.c.l.b16 %v669
      %v1116 = vunpack.c.h.b16 %v669
      %v1117 = vunpack.c.l.b16 %v670
      %v1118 = vunpack.c.h.b16 %v670
      %v1119 = vunpack.c.l.b16 %v671
      %v1120 = vunpack.c.h.b16 %v671
      %v1121 = vunpack.c.l.b16 %v672
      %v1122 = vunpack.c.h.b16 %v672
      %v1123 = vunpack.c.l.b16 %v673
      %v1124 = vunpack.c.h.b16 %v673
      %v1125 = vunpack.c.l.b16 %v674
      %v1126 = vunpack.c.h.b16 %v674
      %v1127 = vunpack.c.l.b16 %v675
      %v1128 = vunpack.c.h.b16 %v675
      %v1129 = vunpack.c.l.b16 %v676
      %v1130 = vunpack.c.h.b16 %v676
      %v1131 = vunpack.c.l.b16 %v677
      %v1132 = vunpack.c.h.b16 %v677
      %v1133 = vunpack.c.l.b16 %v678
      %v1134 = vunpack.c.h.b16 %v678
      %v1135 = vunpack.c.l.b16 %v679
      %v1136 = vunpack.c.h.b16 %v679
      %v1137 = vunpack.c.l.b16 %v680
      %v1138 = vunpack.c.h.b16 %v680
      %v1139 = vunpack.c.l.b16 %v681
      %v1140 = vunpack.c.h.b16 %v681
      %v1141 = vunpack.c.l.b16 %v682
      %v1142 = vunpack.c.h.b16 %v682
      %v1143 = vunpack.c.l.b16 %v683
      %v1144 = vunpack.c.h.b16 %v683
      %v1145 = vunpack.c.l.b16 %v684
      %v1146 = vunpack.c.h.b16 %v684
      %v1147 = vunpack.c.l.b16 %v685
      %v1148 = vunpack.c.h.b16 %v685
      %v1149 = vunpack.c.l.b16 %v686
      %v1150 = vunpack.c.h.b16 %v686
      %v1151 = vunpack.c.l.b16 %v687
      %v1152 = vunpack.c.h.b16 %v687
      %v1153 = vunpack.c.l.b16 %v688
      %v1154 = vunpack.c.h.b16 %v688
      %v1155 = vunpack.c.l.b16 %v689
      %v1156 = vunpack.c.h.b16 %v689
      %v1157 = vunpack.c.l.b16 %v690
      %v1158 = vunpack.c.h.b16 %v690
      %v1159 = vunpack.c.l.b16 %v691
      %v1160 = vunpack.c.h.b16 %v691
      %v1161 = vunpack.c.l.b16 %v692
      %v1162 = vunpack.c.h.b16 %v692
      %v1163 = vunpack.c.l.b16 %v693
      %v1164 = vunpack.c.h.b16 %v693
      %v1165 = vunpack.c.l.b16 %v694
      %v1166 = vunpack.c.h.b16 %v694
      %v1167 = vunpack.c.l.b16 %v695
      %v1168 = vunpack.c.h.b16 %v695
      %v1169 = vunpack.c.l.b16 %v696
      %v1170 = vunpack.c.h.b16 %v696
      %v1171 = vunpack.c.l.b16 %v697
      %v1172 = vunpack.c.h.b16 %v697
      %v1173 = vunpack.c.l.b16 %v698
      %v1174 = vunpack.c.h.b16 %v698
      %v1175 = vunpack.c.l.b16 %v699
      %v1176 = vunpack.c.h.b16 %v699
      %v1177 = vunpack.c.l.b16 %v700
      %v1178 = vunpack.c.h.b16 %v700
      %v1179 = vunpack.c.l.b16 %v701
      %v1180 = vunpack.c.h.b16 %v701
      %v1181 = vunpack.c.l.b16 %v702
      %v1182 = vunpack.c.h.b16 %v702
      %v1183 = vunpack.c.l.b16 %v703
      %v1184 = vunpack.c.h.b16 %v703
      %v1185 = vunpack.c.l.b16 %v704
      %v1186 = vunpack.c.h.b16 %v704
      %v1187 = vunpack.c.l.b16 %v705
      %v1188 = vunpack.c.h.b16 %v705
      %v1189 = vunpack.c.l.b16 %v706
      %v1190 = vunpack.c.h.b16 %v706
      %v1191 = vunpack.c.l.b16 %v707
      %v1192 = vunpack.c.h.b16 %v707
      %v1193 = vunpack.c.l.b16 %v708
      %v1194 = vunpack.c.h.b16 %v708
      %v1195 = vunpack.c.l.b16 %v709
      %v1196 = vunpack.c.h.b16 %v709
      %v1197 = vunpack.c.l.b16 %v710
      %v1198 = vunpack.c.h.b16 %v710
      %v1199 = vunpack.c.l.b16 %v711
      %v1200 = vunpack.c.h.b16 %v711
      %v1201 = vunpack.c.l.b16 %v712
      %v1202 = vunpack.c.h.b16 %v712
      %v1203 = vunpack.c.l.b16 %v713
      %v1204 = vunpack.c.h.b16 %v713
      %v1205 = vunpack.c.l.b16 %v714
      %v1206 = vunpack.c.h.b16 %v714
      %v1207 = vunpack.c.l.b16 %v715
      %v1208 = vunpack.c.h.b16 %v715
      %v1209 = vunpack.c.l.b16 %v716
      %v1210 = vunpack.c.h.b16 %v716
      %v1211 = vunpack.c.l.b16 %v717
      %v1212 = vunpack.c.h.b16 %v717
      %v1213 = vunpack.c.l.b16 %v718
      %v1214 = vunpack.c.h.b16 %v718
      %v1215 = vunpack.c.l.b16 %v719
      %v1216 = vunpack.c.h.b16 %v719
      %v1217 = vunpack.c.l.b16 %v720
      %v1218 = vunpack.c.h.b16 %v720
      %v1219 = vunpack.c.l.b16 %v721
      %v1220 = vunpack.c.h.b16 %v721
      %v1221 = vunpack.c.l.b16 %v722
      %v1222 = vunpack.c.h.b16 %v722
      %v1223 = vunpack.c.l.b16 %v723
      %v1224 = vunpack.c.h.b16 %v723
      %v1225 = vunpack.c.l.b16 %v724
      %v1226 = vunpack.c.h.b16 %v724
      %v1227 = vunpack.c.l.b16 %v725
      %v1228 = vunpack.c.h.b16 %v725
      %v1229 = vunpack.c.l.b16 %v726
      %v1230 = vunpack.c.h.b16 %v726
      %v1231 = vunpack.c.l.b16 %v727
      %v1232 = vunpack.c.h.b16 %v727
      %v1233 = vunpack.c.l.b16 %v728
      %v1234 = vunpack.c.h.b16 %v728
      %v1235 = vunpack.c.l.b16 %v729
      %v1236 = vunpack.c.h.b16 %v729
      %v1237 = vunpack.c.l.b16 %v730
      %v1238 = vunpack.c.h.b16 %v730
      %v1239 = vunpack.c.l.b16 %v731
      %v1240 = vunpack.c.h.b16 %v731
      %v1241 = vunpack.c.l.b16 %v732
      %v1242 = vunpack.c.h.b16 %v732
      %v1243 = vunpack.c.l.b16 %v733
      %v1244 = vunpack.c.h.b16 %v733
      %v1245 = vunpack.c.l.b16 %v734
      %v1246 = vunpack.c.h.b16 %v734
      %v1247 = vunpack.c.l.b16 %v735
      %v1248 = vunpack.c.h.b16 %v735
      %v1249 = vunpack.c.l.b16 %v736
      %v1250 = vunpack.c.h.b16 %v736
      %v1251 = vunpack.c.l.b16 %v737
      %v1252 = vunpack.c.h.b16 %v737
      %v1253 = vunpack.c.l.b16 %v738
      %v1254 = vunpack.c.h.b16 %v738
      %v1255 = vunpack.c.l.b16 %v739
      %v1256 = vunpack.c.h.b16 %v739
      %v1257 = vunpack.c.l.b16 %v740
      %v1258 = vunpack.c.h.b16 %v740
      %v1259 = vunpack.c.l.b16 %v741
      %v1260 = vunpack.c.h.b16 %v741
      %v1261 = vunpack.c.l.b16 %v742
      %v1262 = vunpack.c.h.b16 %v742
      %v1263 = vunpack.c.l.b16 %v743
      %v1264 = vunpack.c.h.b16 %v743
      %v1265 = vunpack.c.l.b16 %v744
      %v1266 = vunpack.c.h.b16 %v744
      %v1267 = vunpack.c.l.b16 %v745
      %v1268 = vunpack.c.h.b16 %v745
      %v1269 = vunpack.c.l.b16 %v746
      %v1270 = vunpack.c.h.b16 %v746
      %v1271 = vunpack.c.l.b16 %v747
      %v1272 = vunpack.c.h.b16 %v747
      %v1273 = vunpack.c.l.b16 %v748
      %v1274 = vunpack.c.h.b16 %v748
      %v1275 = vunpack.c.l.b16 %v749
      %v1276 = vunpack.c.h.b16 %v749
      %v1277 = vunpack.c.l.b16 %v750
      %v1278 = vunpack.c.h.b16 %v750
      %v1279 = vunpack.c.l.b16 %v751
      %v1280 = vunpack.c.h.b16 %v751
      %v1281 = vunpack.c.l.b16 %v752
      %v1282 = vunpack.c.h.b16 %v752
      %v1283 = vunpack.c.l.b16 %v753
      %v1284 = vunpack.c.h.b16 %v753
      %v1285 = vunpack.c.l.b16 %v754
      %v1286 = vunpack.c.h.b16 %v754
      %v1287 = vunpack.c.l.b16 %v755
      %v1288 = vunpack.c.h.b16 %v755
      %v1289 = vunpack.c.l.b16 %v756
      %v1290 = vunpack.c.h.b16 %v756
      %v1291 = vunpack.c.l.b16 %v757
      %v1292 = vunpack.c.h.b16 %v757
      %v1293 = vunpack.c.l.b16 %v758
      %v1294 = vunpack.c.h.b16 %v758
      %v1295 = vunpack.c.l.b16 %v759
      %v1296 = vunpack.c.h.b16 %v759
      %v1297 = vunpack.c.l.b16 %v760
      %v1298 = vunpack.c.h.b16 %v760
      %v1299 = vunpack.c.l.b16 %v761
      %v1300 = vunpack.c.h.b16 %v761
      %v1301 = vunpack.c.l.b16 %v762
      %v1302 = vunpack.c.h.b16 %v762
      %v1303 = vunpack.c.l.b16 %v763
      %v1304 = vunpack.c.h.b16 %v763
      %v1305 = vunpack.c.l.b16 %v764
      %v1306 = vunpack.c.h.b16 %v764
      %v1307 = vunpack.c.l.b16 %v765
      %v1308 = vunpack.c.h.b16 %v765
      %v1309 = vunpack.c.l.b16 %v766
      %v1310 = vunpack.c.h.b16 %v766
      %v1311 = vunpack.c.l.b16 %v767
      %v1312 = vunpack.c.h.b16 %v767
      %v1313 = vunpack.c.l.b16 %v768
      %v1314 = vunpack.c.h.b16 %v768
      %v1315 = vunpack.c.l.b16 %v769
      %v1316 = vunpack.c.h.b16 %v769
      %v1317 = vunpack.c.l.b16 %v770
      %v1318 = vunpack.c.h.b16 %v770
      %v1319 = vunpack.c.l.b16 %v771
      %v1320 = vunpack.c.h.b16 %v771
      %v1321 = vunpack.c.l.b16 %v772
      %v1322 = vunpack.c.h.b16 %v772
      %v1323 = vunpack.c.l.b16 %v773
      %v1324 = vunpack.c.h.b16 %v773
      %v1325 = vunpack.c.l.b16 %v774
      %v1326 = vunpack.c.h.b16 %v774
      %v1327 = vunpack.c.l.b16 %v775
      %v1328 = vunpack.c.h.b16 %v775
      %v1329 = vunpack.c.l.b16 %v776
      %v1330 = vunpack.c.h.b16 %v776
      %v1331 = vunpack.c.l.b16 %v777
      %v1332 = vunpack.c.h.b16 %v777
      %v1333 = vunpack.c.l.b16 %v778
      %v1334 = vunpack.c.h.b16 %v778
      %v1335 = vunpack.c.l.b16 %v779
      %v1336 = vunpack.c.h.b16 %v779
      %v1337 = vunpack.c.l.b16 %v780
      %v1338 = vunpack.c.h.b16 %v780
      %v1339 = vunpack.c.l.b16 %v781
      %v1340 = vunpack.c.h.b16 %v781
      %v1341 = vunpack.c.l.b16 %v782
      %v1342 = vunpack.c.h.b16 %v782
      %v1343 = vunpack.c.l.b16 %v783
      %v1344 = vunpack.c.h.b16 %v783
      %v1345 = vunpack.c.l.b16 %v784
      %v1346 = vunpack.c.h.b16 %v784
      %v1347 = vunpack.c.l.b16 %v785
      %v1348 = vunpack.c.h.b16 %v785
      %v1349 = vunpack.c.l.b16 %v786
      %v1350 = vunpack.c.h.b16 %v786
      %v1351 = vunpack.c.l.b16 %v787
      %v1352 = vunpack.c.h.b16 %v787
      %v1353 = vunpack.c.l.b16 %v788
      %v1354 = vunpack.c.h.b16 %v788
      %v1355 = vunpack.c.l.b16 %v789
      %v1356 = vunpack.c.h.b16 %v789
      %v1357 = vunpack.c.l.b16 %v790
      %v1358 = vunpack.c.h.b16 %v790
      %v1359 = vunpack.c.l.b16 %v791
      %v1360 = vunpack.c.h.b16 %v791
      %v1361 = vunpack.c.l.b16 %v792
      %v1362 = vunpack.c.h.b16 %v792
      %v1363 = vunpack.c.l.b16 %v793
      %v1364 = vunpack.c.h.b16 %v793
      %v1365 = vunpack.c.l.b16 %v794
      %v1366 = vunpack.c.h.b16 %v794
      %v1367 = vunpack.c.l.b16 %v795
      %v1368 = vunpack.c.h.b16 %v795
      %v1369 = vunpack.c.l.b16 %v796
      %v1370 = vunpack.c.h.b16 %v796
      %v1371 = vunpack.c.l.b16 %v797
      %v1372 = vunpack.c.h.b16 %v797
      %v1373 = vunpack.c.l.b16 %v798
      %v1374 = vunpack.c.h.b16 %v798
      %v1375 = vpack.c.b16 %v995, %v991
      %v1376 = vpack.c.b16 %v996, %v992
      %v1377 = vpack.c.b16 %v997, %v993
      %v1378 = vpack.c.b16 %v998, %v994
      %v1379 = vpack.c.b16 %v1003, %v999
      %v1380 = vpack.c.b16 %v1004, %v1000
      %v1381 = vpack.c.b16 %v1005, %v1001
      %v1382 = vpack.c.b16 %v1006, %v1002
      %v1383 = vpack.c.b16 %v1011, %v1007
      %v1384 = vpack.c.b16 %v1012, %v1008
      %v1385 = vpack.c.b16 %v1013, %v1009
      %v1386 = vpack.c.b16 %v1014, %v1010
      %v1387 = vpack.c.b16 %v1019, %v1015
      %v1388 = vpack.c.b16 %v1020, %v1016
      %v1389 = vpack.c.b16 %v1021, %v1017
      %v1390 = vpack.c.b16 %v1022, %v1018
      %v1391 = vpack.c.b16 %v1027, %v1023
      %v1392 = vpack.c.b16 %v1028, %v1024
      %v1393 = vpack.c.b16 %v1029, %v1025
      %v1394 = vpack.c.b16 %v1030, %v1026
      %v1395 = vpack.c.b16 %v1035, %v1031
      %v1396 = vpack.c.b16 %v1036, %v1032
      %v1397 = vpack.c.b16 %v1037, %v1033
      %v1398 = vpack.c.b16 %v1038, %v1034
      %v1399 = vpack.c.b16 %v1043, %v1039
      %v1400 = vpack.c.b16 %v1044, %v1040
      %v1401 = vpack.c.b16 %v1045, %v1041
      %v1402 = vpack.c.b16 %v1046, %v1042
      %v1403 = vpack.c.b16 %v1051, %v1047
      %v1404 = vpack.c.b16 %v1052, %v1048
      %v1405 = vpack.c.b16 %v1053, %v1049
      %v1406 = vpack.c.b16 %v1054, %v1050
      %v1407 = vpack.c.b16 %v1059, %v1055
      %v1408 = vpack.c.b16 %v1060, %v1056
      %v1409 = vpack.c.b16 %v1061, %v1057
      %v1410 = vpack.c.b16 %v1062, %v1058
      %v1411 = vpack.c.b16 %v1067, %v1063
      %v1412 = vpack.c.b16 %v1068, %v1064
      %v1413 = vpack.c.b16 %v1069, %v1065
      %v1414 = vpack.c.b16 %v1070, %v1066
      %v1415 = vpack.c.b16 %v1075, %v1071
      %v1416 = vpack.c.b16 %v1076, %v1072
      %v1417 = vpack.c.b16 %v1077, %v1073
      %v1418 = vpack.c.b16 %v1078, %v1074
      %v1419 = vpack.c.b16 %v1083, %v1079
      %v1420 = vpack.c.b16 %v1084, %v1080
      %v1421 = vpack.c.b16 %v1085, %v1081
      %v1422 = vpack.c.b16 %v1086, %v1082
      %v1423 = vpack.c.b16 %v1091, %v1087
      %v1424 = vpack.c.b16 %v1092, %v1088
      %v1425 = vpack.c.b16 %v1093, %v1089
      %v1426 = vpack.c.b16 %v1094, %v1090
      %v1427 = vpack.c.b16 %v1099, %v1095
      %v1428 = vpack.c.b16 %v1100, %v1096
      %v1429 = vpack.c.b16 %v1101, %v1097
      %v1430 = vpack.c.b16 %v1102, %v1098
      %v1431 = vpack.c.b16 %v1107, %v1103
      %v1432 = vpack.c.b16 %v1108, %v1104
      %v1433 = vpack.c.b16 %v1109, %v1105
      %v1434 = vpack.c.b16 %v1110, %v1106
      %v1435 = vpack.c.b16 %v1115, %v1111
      %v1436 = vpack.c.b16 %v1116, %v1112
      %v1437 = vpack.c.b16 %v1117, %v1113
      %v1438 = vpack.c.b16 %v1118, %v1114
      %v1439 = vpack.c.b16 %v1123, %v1119
      %v1440 = vpack.c.b16 %v1124, %v1120
      %v1441 = vpack.c.b16 %v1125, %v1121
      %v1442 = vpack.c.b16 %v1126, %v1122
      %v1443 = vpack.c.b16 %v1131, %v1127
      %v1444 = vpack.c.b16 %v1132, %v1128
      %v1445 = vpack.c.b16 %v1133, %v1129
      %v1446 = vpack.c.b16 %v1134, %v1130
      %v1447 = vpack.c.b16 %v1139, %v1135
      %v1448 = vpack.c.b16 %v1140, %v1136
      %v1449 = vpack.c.b16 %v1141, %v1137
      %v1450 = vpack.c.b16 %v1142, %v1138
      %v1451 = vpack.c.b16 %v1147, %v1143
      %v1452 = vpack.c.b16 %v1148, %v1144
      %v1453 = vpack.c.b16 %v1149, %v1145
      %v1454 = vpack.c.b16 %v1150, %v1146
      %v1455 = vpack.c.b16 %v1155, %v1151
      %v1456 = vpack.c.b16 %v1156, %v1152
      %v1457 = vpack.c.b16 %v1157, %v1153
      %v1458 = vpack.c.b16 %v1158, %v1154
      %v1459 = vpack.c.b16 %v1163, %v1159
      %v1460 = vpack.c.b16 %v1164, %v1160
      %v1461 = vpack.c.b16 %v1165, %v1161
      %v1462 = vpack.c.b16 %v1166, %v1162
      %v1463 = vpack.c.b16 %v1171, %v1167
      %v1464 = vpack.c.b16 %v1172, %v1168
      %v1465 = vpack.c.b16 %v1173, %v1169
      %v1466 = vpack.c.b16 %v1174, %v1170
      %v1467 = vpack.c.b16 %v1179, %v1175
      %v1468 = vpack.c.b16 %v1180, %v1176
      %v1469 = vpack.c.b16 %v1181, %v1177
      %v1470 = vpack.c.b16 %v1182, %v1178
      %v1471 = vpack.c.b16 %v1187, %v1183
      %v1472 = vpack.c.b16 %v1188, %v1184
      %v1473 = vpack.c.b16 %v1189, %v1185
      %v1474 = vpack.c.b16 %v1190, %v1186
      %v1475 = vpack.c.b16 %v1195, %v1191
      %v1476 = vpack.c.b16 %v1196, %v1192
      %v1477 = vpack.c.b16 %v1197, %v1193
      %v1478 = vpack.c.b16 %v1198, %v1194
      %v1479 = vpack.c.b16 %v1203, %v1199
      %v1480 = vpack.c.b16 %v1204, %v1200
      %v1481 = vpack.c.b16 %v1205, %v1201
      %v1482 = vpack.c.b16 %v1206, %v1202
      %v1483 = vpack.c.b16 %v1211, %v1207
      %v1484 = vpack.c.b16 %v1212, %v1208
      %v1485 = vpack.c.b16 %v1213, %v1209
      %v1486 = vpack.c.b16 %v1214, %v1210
      %v1487 = vpack.c.b16 %v1219, %v1215
      %v1488 = vpack.c.b16 %v1220, %v1216
      %v1489 = vpack.c.b16 %v1221, %v1217
      %v1490 = vpack.c.b16 %v1222, %v1218
      %v1491 = vpack.c.b16 %v1227, %v1223
      %v1492 = vpack.c.b16 %v1228, %v1224
      %v1493 = vpack.c.b16 %v1229, %v1225
      %v1494 = vpack.c.b16 %v1230, %v1226
      %v1495 = vpack.c.b16 %v1235, %v1231
      %v1496 = vpack.c.b16 %v1236, %v1232
      %v1497 = vpack.c.b16 %v1237, %v1233
      %v1498 = vpack.c.b16 %v1238, %v1234
      %v1499 = vpack.c.b16 %v1243, %v1239
      %v1500 = vpack.c.b16 %v1244, %v1240
      %v1501 = vpack.c.b16 %v1245, %v1241
      %v1502 = vpack.c.b16 %v1246, %v1242
      %v1503 = vpack.c.b16 %v1251, %v1247
      %v1504 = vpack.c.b16 %v1252, %v1248
      %v1505 = vpack.c.b16 %v1253, %v1249
      %v1506 = vpack.c.b16 %v1254, %v1250
      %v1507 = vpack.c.b16 %v1259, %v1255
      %v1508 = vpack.c.b16 %v1260, %v1256
      %v1509 = vpack.c.b16 %v1261, %v1257
      %v1510 = vpack.c.b16 %v1262, %v1258
      %v1511 = vpack.c.b16 %v1267, %v1263
      %v1512 = vpack.c.b16 %v1268, %v1264
      %v1513 = vpack.c.b16 %v1269, %v1265
      %v1514 = vpack.c.b16 %v1270, %v1266
      %v1515 = vpack.c.b16 %v1275, %v1271
      %v1516 = vpack.c.b16 %v1276, %v1272
      %v1517 = vpack.c.b16 %v1277, %v1273
      %v1518 = vpack.c.b16 %v1278, %v1274
      %v1519 = vpack.c.b16 %v1283, %v1279
      %v1520 = vpack.c.b16 %v1284, %v1280
      %v1521 = vpack.c.b16 %v1285, %v1281
      %v1522 = vpack.c.b16 %v1286, %v1282
      %v1523 = vpack.c.b16 %v1291, %v1287
      %v1524 = vpack.c.b16 %v1292, %v1288
      %v1525 = vpack.c.b16 %v1293, %v1289
      %v1526 = vpack.c.b16 %v1294, %v1290
      %v1527 = vpack.c.b16 %v1299, %v1295
      %v1528 = vpack.c.b16 %v1300, %v1296
      %v1529 = vpack.c.b16 %v1301, %v1297
      %v1530 = vpack.c.b16 %v1302, %v1298
      %v1531 = vpack.c.b16 %v1307, %v1303
      %v1532 = vpack.c.b16 %v1308, %v1304
      %v1533 = vpack.c.b16 %v1309, %v1305
      %v1534 = vpack.c.b16 %v1310, %v1306
      %v1535 = vpack.c.b16 %v1315, %v1311
      %v1536 = vpack.c.b16 %v1316, %v1312
      %v1537 = vpack.c.b16 %v1317, %v1313
      %v1538 = vpack.c.b16 %v1318, %v1314
      %v1539 = vpack.c.b16 %v1323, %v1319
      %v1540 = vpack.c.b16 %v1324, %v1320
      %v1541 = vpack.c.b16 %v1325, %v1321
      %v1542 = vpack.c.b16 %v1326, %v1322
      %v1543 = vpack.c.b16 %v1331, %v1327
      %v1544 = vpack.c.b16 %v1332, %v1328
      %v1545 = vpack.c.b16 %v1333, %v1329
      %v1546 = vpack.c.b16 %v1334, %v1330
      %v1547 = vpack.c.b16 %v1339, %v1335
      %v1548 = vpack.c.b16 %v1340, %v1336
      %v1549 = vpack.c.b16 %v1341, %v1337
      %v1550 = vpack.c.b16 %v1342, %v1338
      %v1551 = vpack.c.b16 %v1347, %v1343
      %v1552 = vpack.c.b16 %v1348, %v1344
      %v1553 = vpack.c.b16 %v1349, %v1345
      %v1554 = vpack.c.b16 %v1350, %v1346
      %v1555 = vpack.c.b16 %v1355, %v1351
      %v1556 = vpack.c.b16 %v1356, %v1352
      %v1557 = vpack.c.b16 %v1357, %v1353
      %v1558 = vpack.c.b16 %v1358, %v1354
      %v1559 = vpack.c.b16 %v1363, %v1359
      %v1560 = vpack.c.b16 %v1364, %v1360
      %v1561 = vpack.c.b16 %v1365, %v1361
      %v1562 = vpack.c.b16 %v1366, %v1362
      %v1563 = vpack.c.b16 %v1371, %v1367
      %v1564 = vpack.c.b16 %v1372, %v1368
      %v1565 = vpack.c.b16 %v1373, %v1369
      %v1566 = vpack.c.b16 %v1374, %v1370
      %1759 = vmatprep.subr.bf16.mxu0 %v1376
      %1760 = vmatpush1.bf16.msra.mxu0 %v1375
      %1761 = vmatprep.subr.bf16.mxu0 %v1380
      %1762 = vmatpush1.bf16.msra.mxu0 %v1379
      %1763 = vmatprep.subr.bf16.mxu0 %v1384
      %1764 = vmatpush1.bf16.msra.mxu0 %v1383
      %1765 = vmatprep.subr.bf16.mxu0 %v1388
      %1766 = vmatpush1.bf16.msra.mxu0 %v1387
      %1767 = vmatprep.subr.bf16.mxu0 %v1392
      %1768 = vmatpush1.bf16.msra.mxu0 %v1391
      %1769 = vmatprep.subr.bf16.mxu0 %v1396
      %1770 = vmatpush1.bf16.msra.mxu0 %v1395
      %1771 = vmatprep.subr.bf16.mxu0 %v1400
      %1772 = vmatpush1.bf16.msra.mxu0 %v1399
      %1773 = vmatprep.subr.bf16.mxu0 %v1404
      %1774 = vmatpush1.bf16.msra.mxu0 %v1403
      %1775 = vmatprep.subr.bf16.mxu0 %v1408
      %1776 = vmatpush1.bf16.msra.mxu0 %v1407
      %1777 = vmatprep.subr.bf16.mxu0 %v1412
      %1778 = vmatpush1.bf16.msra.mxu0 %v1411
      %1779 = vmatprep.subr.bf16.mxu0 %v1416
      %1780 = vmatpush1.bf16.msra.mxu0 %v1415
      %1781 = vmatprep.subr.bf16.mxu0 %v1420
      %1782 = vmatpush1.bf16.msra.mxu0 %v1419
      %1783 = vmatprep.subr.bf16.mxu0 %v1424
      %1784 = vmatpush1.bf16.msra.mxu0 %v1423
      %1785 = vmatprep.subr.bf16.mxu0 %v1428
      %1786 = vmatpush1.bf16.msra.mxu0 %v1427
      %1787 = vmatprep.subr.bf16.mxu0 %v1432
      %1788 = vmatpush1.bf16.msra.mxu0 %v1431
      %1789 = vmatprep.subr.bf16.mxu0 %v1436
      %1790 = vmatpush1.bf16.msra.mxu0 %v1435
      %1791 = vmatprep.mubr.bf16.mxu0 %v602
      %1792 = vmatmul.mubr.bf16.gmra.mrb[0].mxu0 %v601
      %v1793 = vpop.f32.mrb[0].mxu0
      %v1794 = vadd.f32 0.0, %v1793
      %v1795 = vpop.f32.mrb[0].mxu0
      %v1796 = vadd.f32 0.0, %v1795
      %v1797 = vpop.f32.mrb[0].mxu0
      %v1798 = vpop.f32.mrb[0].mxu0
      %1799 = vdwg.mxu0
      %1800 = vmatprep.subr.bf16.mxu0 %v1440
      %1801 = vmatpush1.bf16.msra.mxu0 %v1439
      %1802 = vmatprep.subr.bf16.mxu0 %v1444
      %1803 = vmatpush1.bf16.msra.mxu0 %v1443
      %1804 = vmatprep.subr.bf16.mxu0 %v1448
      %1805 = vmatpush1.bf16.msra.mxu0 %v1447
      %1806 = vmatprep.subr.bf16.mxu0 %v1452
      %1807 = vmatpush1.bf16.msra.mxu0 %v1451
      %1808 = vmatprep.subr.bf16.mxu0 %v1456
      %1809 = vmatpush1.bf16.msra.mxu0 %v1455
      %1810 = vmatprep.subr.bf16.mxu0 %v1460
      %1811 = vmatpush1.bf16.msra.mxu0 %v1459
      %1812 = vmatprep.subr.bf16.mxu0 %v1464
      %1813 = vmatpush1.bf16.msra.mxu0 %v1463
      %1814 = vmatprep.subr.bf16.mxu0 %v1468
      %1815 = vmatpush1.bf16.msra.mxu0 %v1467
      %1816 = vmatprep.subr.bf16.mxu0 %v1472
      %1817 = vmatpush1.bf16.msra.mxu0 %v1471
      %1818 = vmatprep.subr.bf16.mxu0 %v1476
      %1819 = vmatpush1.bf16.msra.mxu0 %v1475
      %1820 = vmatprep.subr.bf16.mxu0 %v1480
      %1821 = vmatpush1.bf16.msra.mxu0 %v1479
      %1822 = vmatprep.subr.bf16.mxu0 %v1484
      %1823 = vmatpush1.bf16.msra.mxu0 %v1483
      %1824 = vmatprep.subr.bf16.mxu0 %v1488
      %1825 = vmatpush1.bf16.msra.mxu0 %v1487
      %1826 = vmatprep.subr.bf16.mxu0 %v1492
      %1827 = vmatpush1.bf16.msra.mxu0 %v1491
      %1828 = vmatprep.subr.bf16.mxu0 %v1496
      %1829 = vmatpush1.bf16.msra.mxu0 %v1495
      %1830 = vmatprep.subr.bf16.mxu0 %v1500
      %1831 = vmatpush1.bf16.msra.mxu0 %v1499
      %1832 = vmatprep.mubr.bf16.mxu0 %v604
      %1833 = vmatmul.mubr.bf16.gmra.mrb[0].mxu0 %v603
      %v1834 = vpop.f32.mrb[0].mxu0
      %v1835 = vadd.f32 %v1794, %v1834
      %v1836 = vpop.f32.mrb[0].mxu0
      %v1837 = vadd.f32 %v1796, %v1836
      %v1838 = vpop.f32.mrb[0].mxu0
      %v1839 = vpop.f32.mrb[0].mxu0
      %1840 = vdwg.mxu0
      %1841 = vmatprep.subr.bf16.mxu0 %v1504
      %1842 = vmatpush1.bf16.msra.mxu0 %v1503
      %1843 = vmatprep.subr.bf16.mxu0 %v1508
      %1844 = vmatpush1.bf16.msra.mxu0 %v1507
      %1845 = vmatprep.subr.bf16.mxu0 %v1512
      %1846 = vmatpush1.bf16.msra.mxu0 %v1511
      %1847 = vmatprep.subr.bf16.mxu0 %v1516
      %1848 = vmatpush1.bf16.msra.mxu0 %v1515
      %1849 = vmatprep.subr.bf16.mxu0 %v1520
      %1850 = vmatpush1.bf16.msra.mxu0 %v1519
      %1851 = vmatprep.subr.bf16.mxu0 %v1524
      %1852 = vmatpush1.bf16.msra.mxu0 %v1523
      %1853 = vmatprep.subr.bf16.mxu0 %v1528
      %1854 = vmatpush1.bf16.msra.mxu0 %v1527
      %1855 = vmatprep.subr.bf16.mxu0 %v1532
      %1856 = vmatpush1.bf16.msra.mxu0 %v1531
      %1857 = vmatprep.subr.bf16.mxu0 %v1536
      %1858 = vmatpush1.bf16.msra.mxu0 %v1535
      %1859 = vmatprep.subr.bf16.mxu0 %v1540
      %1860 = vmatpush1.bf16.msra.mxu0 %v1539
      %1861 = vmatprep.subr.bf16.mxu0 %v1544
      %1862 = vmatpush1.bf16.msra.mxu0 %v1543
      %1863 = vmatprep.subr.bf16.mxu0 %v1548
      %1864 = vmatpush1.bf16.msra.mxu0 %v1547
      %1865 = vmatprep.subr.bf16.mxu0 %v1552
      %1866 = vmatpush1.bf16.msra.mxu0 %v1551
      %1867 = vmatprep.subr.bf16.mxu0 %v1556
      %1868 = vmatpush1.bf16.msra.mxu0 %v1555
      %1869 = vmatprep.subr.bf16.mxu0 %v1560
      %1870 = vmatpush1.bf16.msra.mxu0 %v1559
      %1871 = vmatprep.subr.bf16.mxu0 %v1564
      %1872 = vmatpush1.bf16.msra.mxu0 %v1563
      %1873 = vmatprep.mubr.bf16.mxu0 %v606
      %1874 = vmatmul.mubr.bf16.gmra.mrb[0].mxu0 %v605
      %v1875 = vpop.f32.mrb[0].mxu0
      %v1876 = vadd.f32 %v1835, %v1875
      %v1877 = vpop.f32.mrb[0].mxu0
      %v1878 = vadd.f32 %v1837, %v1877
      %v1879 = vpop.f32.mrb[0].mxu0
      %v1880 = vpop.f32.mrb[0].mxu0
      %1881 = vdwg.mxu0
      %1882 = vmatprep.subr.bf16.mxu0 %v1378
      %1883 = vmatpush1.bf16.msra.mxu0 %v1377
      %1884 = vmatprep.subr.bf16.mxu0 %v1382
      %1885 = vmatpush1.bf16.msra.mxu0 %v1381
      %1886 = vmatprep.subr.bf16.mxu0 %v1386
      %1887 = vmatpush1.bf16.msra.mxu0 %v1385
      %1888 = vmatprep.subr.bf16.mxu0 %v1390
      %1889 = vmatpush1.bf16.msra.mxu0 %v1389
      %1890 = vmatprep.subr.bf16.mxu0 %v1394
      %1891 = vmatpush1.bf16.msra.mxu0 %v1393
      %1892 = vmatprep.subr.bf16.mxu0 %v1398
      %1893 = vmatpush1.bf16.msra.mxu0 %v1397
      %1894 = vmatprep.subr.bf16.mxu0 %v1402
      %1895 = vmatpush1.bf16.msra.mxu0 %v1401
      %1896 = vmatprep.subr.bf16.mxu0 %v1406
      %1897 = vmatpush1.bf16.msra.mxu0 %v1405
      %1898 = vmatprep.subr.bf16.mxu0 %v1410
      %1899 = vmatpush1.bf16.msra.mxu0 %v1409
      %1900 = vmatprep.subr.bf16.mxu0 %v1414
      %1901 = vmatpush1.bf16.msra.mxu0 %v1413
      %1902 = vmatprep.subr.bf16.mxu0 %v1418
      %1903 = vmatpush1.bf16.msra.mxu0 %v1417
      %1904 = vmatprep.subr.bf16.mxu0 %v1422
      %1905 = vmatpush1.bf16.msra.mxu0 %v1421
      %1906 = vmatprep.subr.bf16.mxu0 %v1426
      %1907 = vmatpush1.bf16.msra.mxu0 %v1425
      %1908 = vmatprep.subr.bf16.mxu0 %v1430
      %1909 = vmatpush1.bf16.msra.mxu0 %v1429
      %1910 = vmatprep.subr.bf16.mxu0 %v1434
      %1911 = vmatpush1.bf16.msra.mxu0 %v1433
      %1912 = vmatprep.subr.bf16.mxu0 %v1438
      %1913 = vmatpush1.bf16.msra.mxu0 %v1437
      %1914 = vmatprep.mubr.bf16.mxu0 %v602
      %1915 = vmatmul.mubr.bf16.gmra.mrb[0].mxu0 %v601
      %v1916 = vpop.f32.mrb[0].mxu0
      %v1917 = vadd.f32 0.0, %v1916
      %v1918 = vpop.f32.mrb[0].mxu0
      %v1919 = vadd.f32 0.0, %v1918
      %v1920 = vpop.f32.mrb[0].mxu0
      %v1921 = vpop.f32.mrb[0].mxu0
      %1922 = vdwg.mxu0
      %1923 = vmatprep.subr.bf16.mxu0 %v1442
      %1924 = vmatpush1.bf16.msra.mxu0 %v1441
      %1925 = vmatprep.subr.bf16.mxu0 %v1446
      %1926 = vmatpush1.bf16.msra.mxu0 %v1445
      %1927 = vmatprep.subr.bf16.mxu0 %v1450
      %1928 = vmatpush1.bf16.msra.mxu0 %v1449
      %1929 = vmatprep.subr.bf16.mxu0 %v1454
      %1930 = vmatpush1.bf16.msra.mxu0 %v1453
      %1931 = vmatprep.subr.bf16.mxu0 %v1458
      %1932 = vmatpush1.bf16.msra.mxu0 %v1457
      %1933 = vmatprep.subr.bf16.mxu0 %v1462
      %1934 = vmatpush1.bf16.msra.mxu0 %v1461
      %1935 = vmatprep.subr.bf16.mxu0 %v1466
      %1936 = vmatpush1.bf16.msra.mxu0 %v1465
      %1937 = vmatprep.subr.bf16.mxu0 %v1470
      %1938 = vmatpush1.bf16.msra.mxu0 %v1469
      %1939 = vmatprep.subr.bf16.mxu0 %v1474
      %1940 = vmatpush1.bf16.msra.mxu0 %v1473
      %1941 = vmatprep.subr.bf16.mxu0 %v1478
      %1942 = vmatpush1.bf16.msra.mxu0 %v1477
      %1943 = vmatprep.subr.bf16.mxu0 %v1482
      %1944 = vmatpush1.bf16.msra.mxu0 %v1481
      %1945 = vmatprep.subr.bf16.mxu0 %v1486
      %1946 = vmatpush1.bf16.msra.mxu0 %v1485
      %1947 = vmatprep.subr.bf16.mxu0 %v1490
      %1948 = vmatpush1.bf16.msra.mxu0 %v1489
      %1949 = vmatprep.subr.bf16.mxu0 %v1494
      %1950 = vmatpush1.bf16.msra.mxu0 %v1493
      %1951 = vmatprep.subr.bf16.mxu0 %v1498
      %1952 = vmatpush1.bf16.msra.mxu0 %v1497
      %1953 = vmatprep.subr.bf16.mxu0 %v1502
      %1954 = vmatpush1.bf16.msra.mxu0 %v1501
      %1955 = vmatprep.mubr.bf16.mxu0 %v604
      %1956 = vmatmul.mubr.bf16.gmra.mrb[0].mxu0 %v603
      %v1957 = vpop.f32.mrb[0].mxu0
      %v1958 = vadd.f32 %v1917, %v1957
      %v1959 = vpop.f32.mrb[0].mxu0
      %v1960 = vadd.f32 %v1919, %v1959
      %v1961 = vpop.f32.mrb[0].mxu0
      %v1962 = vpop.f32.mrb[0].mxu0
      %1963 = vdwg.mxu0
      %1964 = vmatprep.subr.bf16.mxu0 %v1506
      %1965 = vmatpush1.bf16.msra.mxu0 %v1505
      %1966 = vmatprep.subr.bf16.mxu0 %v1510
      %1967 = vmatpush1.bf16.msra.mxu0 %v1509
      %1968 = vmatprep.subr.bf16.mxu0 %v1514
      %1969 = vmatpush1.bf16.msra.mxu0 %v1513
      %1970 = vmatprep.subr.bf16.mxu0 %v1518
      %1971 = vmatpush1.bf16.msra.mxu0 %v1517
      %1972 = vmatprep.subr.bf16.mxu0 %v1522
      %1973 = vmatpush1.bf16.msra.mxu0 %v1521
      %1974 = vmatprep.subr.bf16.mxu0 %v1526
      %1975 = vmatpush1.bf16.msra.mxu0 %v1525
      %1976 = vmatprep.subr.bf16.mxu0 %v1530
      %1977 = vmatpush1.bf16.msra.mxu0 %v1529
      %1978 = vmatprep.subr.bf16.mxu0 %v1534
      %1979 = vmatpush1.bf16.msra.mxu0 %v1533
      %1980 = vmatprep.subr.bf16.mxu0 %v1538
      %1981 = vmatpush1.bf16.msra.mxu0 %v1537
      %1982 = vmatprep.subr.bf16.mxu0 %v1542
      %1983 = vmatpush1.bf16.msra.mxu0 %v1541
      %1984 = vmatprep.subr.bf16.mxu0 %v1546
      %1985 = vmatpush1.bf16.msra.mxu0 %v1545
      %1986 = vmatprep.subr.bf16.mxu0 %v1550
      %1987 = vmatpush1.bf16.msra.mxu0 %v1549
      %1988 = vmatprep.subr.bf16.mxu0 %v1554
      %1989 = vmatpush1.bf16.msra.mxu0 %v1553
      %1990 = vmatprep.subr.bf16.mxu0 %v1558
      %1991 = vmatpush1.bf16.msra.mxu0 %v1557
      %1992 = vmatprep.subr.bf16.mxu0 %v1562
      %1993 = vmatpush1.bf16.msra.mxu0 %v1561
      %1994 = vmatprep.subr.bf16.mxu0 %v1566
      %1995 = vmatpush1.bf16.msra.mxu0 %v1565
      %1996 = vmatprep.mubr.bf16.mxu0 %v606
      %1997 = vmatmul.mubr.bf16.gmra.mrb[0].mxu0 %v605
      %v1998 = vpop.f32.mrb[0].mxu0
      %v1999 = vadd.f32 %v1958, %v1998
      %v2000 = vpop.f32.mrb[0].mxu0
      %v2001 = vadd.f32 %v1960, %v2000
      %v2002 = vpop.f32.mrb[0].mxu0
      %v2003 = vpop.f32.mrb[0].mxu0
      %2004 = vdwg.mxu0
      %v2005 = vmul.f32 %v1876, %v1876
      %v2006 = vmul.f32 %v1878, %v1878
      %v2007 = vmul.f32 %v1999, %v1999
      %v2008 = vmul.f32 %v2001, %v2001
      %v2009 = vadd.f32 %v2005, %v2006
      %v2010 = vadd.f32 %v2009, %v2007
      %v2011 = vadd.f32 %v2010, %v2008
      %2012 = vadd.xlane.f32.xlu0 %v2011
      %v2013 = vpop.xlane.xlu0 %2012
      %vm2014 = vcmp.gt.f32.partialorder %v2013, 0.0
      %v2015 = vsel %vm2014, %v2013, 1.0
      %v2016 = vrsqrt.pop %v2015
      %v2017 = vmul.f32 %v1876, %v2016
      %v2018 = vmul.f32 %v1878, %v2016
      %v2019 = vmul.f32 %v1999, %v2016
      %v2020 = vmul.f32 %v2001, %v2016
      %2021 = vst [vmem:[#allocation3] sm:$0xff] %v2017
      %2022 = vst [vmem:[#allocation3 + $0x8] sm:$0xff] %v2018
      %2023 = vst [vmem:[#allocation3 + $0x10] sm:$0xff] %v2019
      %2024 = vst [vmem:[#allocation3 + $0x18] sm:$0xff] %v2020
    $region17: #{clip_model_forward.1} parent=1 // pred_fallthru
      _
    // Predicated region
    $region18: #{clip_model_forward.1} parent=1 // pred_check
      _
    $region19: #{clip_model_forward.1} parent=1 // pred_check_branch
      %2026 = sbr.rel (0) target = $region21
    $region20: #{clip_model_forward.1} parent=1 // pred_region
      %s2028 = ssub.s32 512, 512
      %2029 = vsyncadd [#allocation4], %s2028
      %s2031 = sshll.u32 [#allocation3], 4
      %s2032 = int_to_ptr.vmem [resolvable:$true] %s2031
      %2034 = dma.vmem_to_hbm [thread:$0]  %s2032, 512, %s2, [#allocation4]
    $region21: #{clip_model_forward.1} parent=1 // pred_fallthru
      _
    // Predicated region
    $region22: #{clip_model_forward.1} parent=1 // pred_check
      _
    $region23: #{clip_model_forward.1} parent=1 // pred_check_branch
      %2036 = sbr.rel (0) target = $region25
    $region24: #{clip_model_forward.1} parent=1 // pred_region
      %2037 = dma.done [#allocation4], 512
    $region25: #{clip_model_forward.1} parent=1 // pred_fallthru
      _
    %2038 = vsyncpa [#allocation4], 1

</llo_original>
